<compile_context>
chip_gen: v6e
topology: v6e:2x2x1
jax: 0.10.0
libtpu: 0.0.40
codegen_flags: <defaults>
</compile_context>

<pallas_src>
import jax
import jax.numpy as jnp
from jax.experimental import pallas as pl
from jax.experimental.pallas import tpu as pltpu


def _round_up(n, m):
    return ((n + m - 1) // m) * m


def wordcnn_kernel(x_ref, wconv_ref, bconv_ref, w1_ref, b1_ref, w2_ref, b2_ref,
                   out_ref):
    # x_ref:     (TB, L, E)    bf16  -- batch tile of concatenated embeddings
    # wconv_ref: (K*E, Fp)     bf16  -- fused conv weight (filter dim zero-padded)
    # bconv_ref: (1, Fp)       f32
    # w1_ref:    (Fp, Fp)      bf16  -- fc1 weight (in, out), zero-padded
    # b1_ref:    (1, Fp)       f32
    # w2_ref:    (Fp, Cp)      bf16  -- fc2 weight (in, out), zero-padded
    # b2_ref:    (1, Cp)       f32   -- padded class lanes hold -1e30 (softmax mask)
    # out_ref:   (TB, Cp)      f32   -- softmax probabilities (lane-dense)
    TB, L, E = x_ref.shape
    KE, Fp = wconv_ref.shape
    K = KE // E
    Lout = L - K + 1

    x = x_ref[...]  # bf16

    # Unfold the K temporal taps along the feature axis -> single fused matmul.
    x_unf = jnp.concatenate([x[:, k:k + Lout, :] for k in range(K)],
                            axis=-1)                       # (TB, Lout, K*E) bf16

    conv = jax.lax.dot_general(
        x_unf, wconv_ref[...],
        dimension_numbers=(((2,), (0,)), ((), ())),
        preferred_element_type=jnp.float32)                # (TB, Lout, Fp) f32
    conv = jnp.maximum(conv + bconv_ref[...].reshape(1, 1, Fp), 0.0)

    # avg_pool1d over the full temporal extent == sum * (1/Lout).
    pooled = jnp.sum(conv, axis=1) * jnp.float32(1.0 / Lout)   # (TB, Fp) f32

    # fc1 + ReLU (bf16 MXU, f32 accumulate; padded lanes stay exactly zero).
    h = jnp.dot(pooled.astype(jnp.bfloat16), w1_ref[...],
                preferred_element_type=jnp.float32) + b1_ref[...]
    h = jnp.maximum(h, 0.0)                                    # (TB, Fp)

    # fc2; padded class lanes pick up the -1e30 bias -> exp() == 0 below.
    logits = jnp.dot(h.astype(jnp.bfloat16), w2_ref[...],
                     preferred_element_type=jnp.float32) + b2_ref[...]  # (TB, Cp)

    # softmax over classes (padded lanes contribute exactly 0).
    m = jnp.max(logits, axis=1, keepdims=True)
    e = jnp.exp(logits - m)
    denom = jnp.sum(e, axis=1, keepdims=True)
    probs = e * pl.reciprocal(denom, approx=True)

    out_ref[...] = probs.astype(out_ref.dtype)


def wordcnn_forward(prem_idx, hypo_idx, params, *, max_batch_tile=256):
    """Embedding gather + weight re-layout in XLA, conv/pool/fc/softmax in Pallas."""
    emb_prem = params["emb_prem"]       # (V, E)
    emb_hypo = params["emb_hypo"]       # (V, E)
    wconv = params["wconv"]             # (F, 1, K, E)  PyTorch Conv2d layout
    bconv = params["bconv"]             # (F,)
    w1 = params["w1"]                   # (F, F)        PyTorch Linear (out, in)
    b1 = params["b1"]                   # (F,)
    w2 = params["w2"]                   # (C, F)
    b2 = params["b2"]                   # (C,)

    F_out, _, K, E = wconv.shape
    C = w2.shape[0]
    B = prem_idx.shape[0]
    L = prem_idx.shape[1] + hypo_idx.shape[1]
    Lout = L - K + 1
    KE = K * E
    Fp = _round_up(F_out, 128)
    Cp = _round_up(C, 128)

    # ---- embedding gather (XLA glue); x stored bf16 to halve HBM bytes. ----
    premise = jnp.take(emb_prem, prem_idx, axis=0)          # (B, Lp, E)
    hypothesis = jnp.take(emb_hypo, hypo_idx, axis=0)       # (B, Lh, E)
    x = jnp.concatenate([premise, hypothesis], axis=1).astype(jnp.bfloat16)

    # ---- weight re-layout: (in -> out), fused conv taps, 128-lane padding. ----
    w_fused = jnp.transpose(wconv[:, 0, :, :], (1, 2, 0)).reshape(KE, F_out)
    w_fused = jnp.pad(w_fused, ((0, 0), (0, Fp - F_out))).astype(jnp.bfloat16)
    bconv_p = jnp.pad(bconv, (0, Fp - F_out)).reshape(1, Fp).astype(jnp.float32)
    w1_p = jnp.pad(w1.T, ((0, Fp - F_out), (0, Fp - F_out))).astype(jnp.bfloat16)
    b1_p = jnp.pad(b1, (0, Fp - F_out)).reshape(1, Fp).astype(jnp.float32)
    w2_p = jnp.pad(w2.T, ((0, Fp - F_out), (0, Cp - C))).astype(jnp.bfloat16)
    # Padded class lanes get a huge negative bias so softmax ignores them.
    b2_p = jnp.pad(b2, (0, Cp - C), constant_values=-1e30)
    b2_p = b2_p.reshape(1, Cp).astype(jnp.float32)

    # ---- batch tiling (tile size is a multiple of 8 for sublane alignment). ----
    tb = min(max_batch_tile, _round_up(B, 8))
    n_tiles = pl.cdiv(B, tb)
    B_pad = n_tiles * tb
    if B_pad != B:
        x = jnp.pad(x, ((0, B_pad - B), (0, 0), (0, 0)))

    cost = pl.CostEstimate(
        flops=2 * B_pad * Lout * KE * Fp + 2 * B_pad * Fp * Fp + 2 * B_pad * Fp * Cp,
        transcendentals=B_pad * Cp,
        bytes_accessed=(x.size * 2
                        + (w_fused.size + w1_p.size + w2_p.size) * 2
                        + (bconv_p.size + b1_p.size + b2_p.size) * 4
                        + B_pad * Cp * 4),
    )

    out = pl.pallas_call(
        wordcnn_kernel,
        out_shape=jax.ShapeDtypeStruct((B_pad, Cp), jnp.float32),
        grid=(n_tiles,),
        in_specs=[
            pl.BlockSpec((tb, L, E), lambda i: (i, 0, 0)),   # streamed per tile
            pl.BlockSpec((KE, Fp), lambda i: (0, 0)),        # weights resident
            pl.BlockSpec((1, Fp), lambda i: (0, 0)),
            pl.BlockSpec((Fp, Fp), lambda i: (0, 0)),
            pl.BlockSpec((1, Fp), lambda i: (0, 0)),
            pl.BlockSpec((Fp, Cp), lambda i: (0, 0)),
            pl.BlockSpec((1, Cp), lambda i: (0, 0)),
        ],
        out_specs=pl.BlockSpec((tb, Cp), lambda i: (i, 0)),
        compiler_params=pltpu.CompilerParams(
            dimension_semantics=("parallel",),
            vmem_limit_bytes=64 * 1024 * 1024,
        ),
        cost_estimate=cost,
    )(x, w_fused, bconv_p, w1_p, b1_p, w2_p, b2_p)

    return out[:B, :C]


def init_params(key, vocab_size, emb_size, num_filters, kernel_k, num_classes):
    ks = jax.random.split(key, 8)
    V = vocab_size + 4
    scale = 0.1
    return {
        "emb_prem": scale * jax.random.normal(ks[0], (V, emb_size), jnp.float32),
        "emb_hypo": scale * jax.random.normal(ks[1], (V, emb_size), jnp.float32),
        "wconv": scale * jax.random.normal(
            ks[2], (num_filters, 1, kernel_k, emb_size), jnp.float32),
        "bconv": scale * jax.random.normal(ks[3], (num_filters,), jnp.float32),
        "w1": scale * jax.random.normal(ks[4], (num_filters, num_filters), jnp.float32),
        "b1": scale * jax.random.normal(ks[5], (num_filters,), jnp.float32),
        "w2": scale * jax.random.normal(ks[6], (num_classes, num_filters), jnp.float32),
        "b2": scale * jax.random.normal(ks[7], (num_classes,), jnp.float32),
    }


def reference_forward(prem_idx, hypo_idx, params):
    """Pure-JAX f32 reference mirroring the PyTorch forward (eval mode)."""
    premise = jnp.take(params["emb_prem"], prem_idx, axis=0)
    hypothesis = jnp.take(params["emb_hypo"], hypo_idx, axis=0)
    x = jnp.concatenate([premise, hypothesis], axis=1)           # (B, L, E)
    wconv, bconv = params["wconv"], params["bconv"]
    F_out, _, K, E = wconv.shape
    L = x.shape[1]
    Lout = L - K + 1
    conv = jnp.zeros((x.shape[0], Lout, F_out), jnp.float32)
    for k in range(K):
        conv = conv + jnp.einsum("ble,fe->blf", x[:, k:k + Lout, :], wconv[:, 0, k, :])
    conv = jax.nn.relu(conv + bconv[None, None, :])
    pooled = jnp.mean(conv, axis=1)
    h = jax.nn.relu(pooled @ params["w1"].T + params["b1"])
    logits = h @ params["w2"].T + params["b2"]
    return jax.nn.softmax(logits, axis=1)


if __name__ == "__main__":
    # Small, deterministic shapes.
    B, Lp, Lh = 2, 8, 8
    emb_size = 32
    vocab_size = 50
    num_filters = 100        # from Config
    num_classes = 3          # from Config / class_num
    kernel_k = 3             # Config.filter_sizes = (3,)

    key = jax.random.PRNGKey(0)
    k_idx1, k_idx2, k_params = jax.random.split(key, 3)

    prem_idx = jax.random.randint(k_idx1, (B, Lp), 0, vocab_size + 4, dtype=jnp.int32)
    hypo_idx = jax.random.randint(k_idx2, (B, Lh), 0, vocab_size + 4, dtype=jnp.int32)

    params = init_params(k_params, vocab_size, emb_size, num_filters,
                         kernel_k, num_classes)

    probs = wordcnn_forward(prem_idx, hypo_idx, params)
    probs = jax.block_until_ready(probs)

    ref = reference_forward(prem_idx, hypo_idx, params)
    assert probs.shape == (B, num_classes)
    # bf16 matmul inputs + approx reciprocal -> compare against the f32
    # reference with a tolerance that covers bf16 quantization.
    assert jnp.allclose(probs, ref, rtol=2e-2, atol=2e-2), (probs, ref)
    assert jnp.allclose(jnp.sum(probs, axis=1), 1.0, atol=2e-3)

    print("KERNEL_OK")
</pallas_src>

<mosaic_0001>
module attributes {stable_mosaic.version = 11 : i64} {
  func.func @wordcnn_kernel(%arg0: i32, %arg1: memref<8x16x32xbf16, #tpu.memory_space<vmem>>, %arg2: memref<96x128xbf16, #tpu.memory_space<vmem>>, %arg3: memref<1x128xf32, #tpu.memory_space<vmem>>, %arg4: memref<128x128xbf16, #tpu.memory_space<vmem>>, %arg5: memref<1x128xf32, #tpu.memory_space<vmem>>, %arg6: memref<128x128xbf16, #tpu.memory_space<vmem>>, %arg7: memref<1x128xf32, #tpu.memory_space<vmem>>, %arg8: memref<8x128xf32, #tpu.memory_space<vmem>>) attributes {dimension_semantics = [#tpu.dimension_semantics<parallel>], iteration_bounds = array<i64: 1>, scalar_prefetch = 0 : i64, scratch_operands = 0 : i64, tpu.core_type = #tpu.core_type<tc>, window_params = [{transform_indices = @transform_0, window_bounds = array<i64: 8, 16, 32>}, {pipeline_mode = #tpu.pipeline_mode<synchronous>, transform_indices = @transform_1, window_bounds = array<i64: 96, 128>}, {pipeline_mode = #tpu.pipeline_mode<synchronous>, transform_indices = @transform_2, window_bounds = array<i64: 1, 128>}, {pipeline_mode = #tpu.pipeline_mode<synchronous>, transform_indices = @transform_3, window_bounds = array<i64: 128, 128>}, {pipeline_mode = #tpu.pipeline_mode<synchronous>, transform_indices = @transform_4, window_bounds = array<i64: 1, 128>}, {pipeline_mode = #tpu.pipeline_mode<synchronous>, transform_indices = @transform_5, window_bounds = array<i64: 128, 128>}, {pipeline_mode = #tpu.pipeline_mode<synchronous>, transform_indices = @transform_6, window_bounds = array<i64: 1, 128>}, {transform_indices = @transform_7, window_bounds = array<i64: 8, 128>}]} {
    %c0 = arith.constant 0 : index
    %c0_0 = arith.constant 0 : index
    %c0_1 = arith.constant 0 : index
    %0 = vector.load %arg1[%c0, %c0_0, %c0_1] : memref<8x16x32xbf16, #tpu.memory_space<vmem>>, vector<8x16x32xbf16>
    %1 = vector.extract_strided_slice %0 {offsets = [0, 0, 0], sizes = [8, 14, 32], strides = [1, 1, 1]} : vector<8x16x32xbf16> to vector<8x14x32xbf16>
    %2 = vector.extract_strided_slice %0 {offsets = [0, 1, 0], sizes = [8, 14, 32], strides = [1, 1, 1]} : vector<8x16x32xbf16> to vector<8x14x32xbf16>
    %3 = vector.extract_strided_slice %0 {offsets = [0, 2, 0], sizes = [8, 14, 32], strides = [1, 1, 1]} : vector<8x16x32xbf16> to vector<8x14x32xbf16>
    %4 = tpu.concatenate %1, %2, %3 in 2 : vector<8x14x32xbf16>, vector<8x14x32xbf16>, vector<8x14x32xbf16> -> vector<8x14x96xbf16>
    %c0_2 = arith.constant 0 : index
    %c0_3 = arith.constant 0 : index
    %5 = vector.load %arg2[%c0_2, %c0_3] : memref<96x128xbf16, #tpu.memory_space<vmem>>, vector<96x128xbf16>
    %cst = arith.constant dense<0.000000e+00> : vector<8x14x128xf32>
    %6 = tpu.matmul %4, %5, %cst {dimension_numbers = #tpu.dot_dimension_numbers<[2], [0], [0, 1], [1], [0, 0, 0, 1, 1, 1], [], []>} : vector<8x14x96xbf16>, vector<96x128xbf16>, vector<8x14x128xf32> -> vector<8x14x128xf32>
    %c0_4 = arith.constant 0 : index
    %c0_5 = arith.constant 0 : index
    %7 = vector.load %arg3[%c0_4, %c0_5] : memref<1x128xf32, #tpu.memory_space<vmem>>, vector<1x128xf32>
    %8 = vector.shape_cast %7 : vector<1x128xf32> to vector<1x1x128xf32>
    %9 = vector.broadcast %8 : vector<1x1x128xf32> to vector<8x14x128xf32>
    %10 = arith.addf %6, %9 : vector<8x14x128xf32>
    %cst_6 = arith.constant 0.000000e+00 : f32
    %11 = vector.broadcast %cst_6 : f32 to vector<8x14x128xf32>
    %12 = arith.maximumf %10, %11 : vector<8x14x128xf32>
    %cst_7 = arith.constant dense<0.000000e+00> : vector<8x128xf32>
    %13 = vector.multi_reduction <add>, %12, %cst_7 [1] : vector<8x14x128xf32> to vector<8x128xf32>
    %cst_8 = arith.constant 0.0714285746 : f32
    %14 = vector.broadcast %cst_8 : f32 to vector<8x128xf32>
    %15 = arith.mulf %13, %14 : vector<8x128xf32>
    %16 = arith.truncf %15 : vector<8x128xf32> to vector<8x128xbf16>
    %c0_9 = arith.constant 0 : index
    %c0_10 = arith.constant 0 : index
    %17 = vector.load %arg4[%c0_9, %c0_10] : memref<128x128xbf16, #tpu.memory_space<vmem>>, vector<128x128xbf16>
    %cst_11 = arith.constant dense<0.000000e+00> : vector<8x128xf32>
    %18 = tpu.matmul %16, %17, %cst_11 {dimension_numbers = #tpu.dot_dimension_numbers<[1], [0], [0], [1], [0, 0, 1, 1], [], []>} : vector<8x128xbf16>, vector<128x128xbf16>, vector<8x128xf32> -> vector<8x128xf32>
    %c0_12 = arith.constant 0 : index
    %c0_13 = arith.constant 0 : index
    %19 = vector.load %arg5[%c0_12, %c0_13] : memref<1x128xf32, #tpu.memory_space<vmem>>, vector<1x128xf32>
    %20 = vector.broadcast %19 : vector<1x128xf32> to vector<8x128xf32>
    %21 = arith.addf %18, %20 : vector<8x128xf32>
    %cst_14 = arith.constant 0.000000e+00 : f32
    %22 = vector.broadcast %cst_14 : f32 to vector<8x128xf32>
    %23 = arith.maximumf %21, %22 : vector<8x128xf32>
    %24 = arith.truncf %23 : vector<8x128xf32> to vector<8x128xbf16>
    %c0_15 = arith.constant 0 : index
    %c0_16 = arith.constant 0 : index
    %25 = vector.load %arg6[%c0_15, %c0_16] : memref<128x128xbf16, #tpu.memory_space<vmem>>, vector<128x128xbf16>
    %cst_17 = arith.constant dense<0.000000e+00> : vector<8x128xf32>
    %26 = tpu.matmul %24, %25, %cst_17 {dimension_numbers = #tpu.dot_dimension_numbers<[1], [0], [0], [1], [0, 0, 1, 1], [], []>} : vector<8x128xbf16>, vector<128x128xbf16>, vector<8x128xf32> -> vector<8x128xf32>
    %c0_18 = arith.constant 0 : index
    %c0_19 = arith.constant 0 : index
    %27 = vector.load %arg7[%c0_18, %c0_19] : memref<1x128xf32, #tpu.memory_space<vmem>>, vector<1x128xf32>
    %28 = vector.broadcast %27 : vector<1x128xf32> to vector<8x128xf32>
    %29 = arith.addf %26, %28 : vector<8x128xf32>
    %cst_20 = arith.constant dense<0xFF800000> : vector<8xf32>
    %30 = vector.multi_reduction <maximumf>, %29, %cst_20 [1] : vector<8x128xf32> to vector<8xf32>
    %31 = vector.shape_cast %30 : vector<8xf32> to vector<8x1xf32>
    %32 = vector.broadcast %31 : vector<8x1xf32> to vector<8x128xf32>
    %33 = arith.subf %29, %32 : vector<8x128xf32>
    %34 = math.exp %33 : vector<8x128xf32>
    %cst_21 = arith.constant dense<0.000000e+00> : vector<8xf32>
    %35 = vector.multi_reduction <add>, %34, %cst_21 [1] : vector<8x128xf32> to vector<8xf32>
    %36 = vector.shape_cast %35 : vector<8xf32> to vector<8x1xf32>
    %37 = tpu.reciprocal %36 {approx = true} : vector<8x1xf32> -> vector<8x1xf32>
    %38 = vector.broadcast %37 : vector<8x1xf32> to vector<8x128xf32>
    %39 = arith.mulf %34, %38 : vector<8x128xf32>
    %c0_22 = arith.constant 0 : index
    %c0_23 = arith.constant 0 : index
    %40 = vector.load %arg8[%c0_22, %c0_23] : memref<8x128xf32, #tpu.memory_space<vmem>>, vector<8x128xf32>
    tpu.vector_store %arg8[%c0_22, %c0_23], %39 {strides = array<i32>} : memref<8x128xf32, #tpu.memory_space<vmem>>, vector<8x128xf32>,
    return
  }
  func.func @transform_0(%arg0: i32) -> (i32, i32, i32) {
    %c0_i32 = arith.constant 0 : i32
    %c0_i32_0 = arith.constant 0 : i32
    %c0_i32_1 = arith.constant 0 : i32
    return %arg0, %c0_i32, %c0_i32_0 : i32, i32, i32
  }
  func.func @transform_1(%arg0: i32) -> (i32, i32) {
    %c0_i32 = arith.constant 0 : i32
    %c0_i32_0 = arith.constant 0 : i32
    %c0_i32_1 = arith.constant 0 : i32
    return %c0_i32, %c0_i32_0 : i32, i32
  }
  func.func @transform_2(%arg0: i32) -> (i32, i32) {
    %c0_i32 = arith.constant 0 : i32
    %c0_i32_0 = arith.constant 0 : i32
    %c0_i32_1 = arith.constant 0 : i32
    return %c0_i32, %c0_i32_0 : i32, i32
  }
  func.func @transform_3(%arg0: i32) -> (i32, i32) {
    %c0_i32 = arith.constant 0 : i32
    %c0_i32_0 = arith.constant 0 : i32
    %c0_i32_1 = arith.constant 0 : i32
    return %c0_i32, %c0_i32_0 : i32, i32
  }
  func.func @transform_4(%arg0: i32) -> (i32, i32) {
    %c0_i32 = arith.constant 0 : i32
    %c0_i32_0 = arith.constant 0 : i32
    %c0_i32_1 = arith.constant 0 : i32
    return %c0_i32, %c0_i32_0 : i32, i32
  }
  func.func @transform_5(%arg0: i32) -> (i32, i32) {
    %c0_i32 = arith.constant 0 : i32
    %c0_i32_0 = arith.constant 0 : i32
    %c0_i32_1 = arith.constant 0 : i32
    return %c0_i32, %c0_i32_0 : i32, i32
  }
  func.func @transform_6(%arg0: i32) -> (i32, i32) {
    %c0_i32 = arith.constant 0 : i32
    %c0_i32_0 = arith.constant 0 : i32
    %c0_i32_1 = arith.constant 0 : i32
    return %c0_i32, %c0_i32_0 : i32, i32
  }
  func.func @transform_7(%arg0: i32) -> (i32, i32) {
    %c0_i32 = arith.constant 0 : i32
    %c0_i32_0 = arith.constant 0 : i32
    return %arg0, %c0_i32 : i32, i32
  }
}

</mosaic_0001>

<llo_original>
// kernel: tpu_custom_call.1
$region0: #{tpu_custom_call.1}
  #allocation0 [shape = 'u32[]', space=smem, size = 0x4, offset = 0x4, fixed_abs, tag = 'smem constant byte address 0x4 - core index']
  #allocation1 [shape = 'u32[144,128]{1,0:T(1,128)}', space=vmem, size = 0x12000, scoped, tag = 'internal scratch']
  %s0 = inlined_call_operand.hbm [shape: bf16[8,16,32], index: 0, kind: input, shape index: {}]
  %s1 = inlined_call_operand.hbm [shape: bf16[96,128], index: 1, kind: input, shape index: {}]
  %s2 = inlined_call_operand.vmem [shape: f32[1,128], index: 2, kind: input, shape index: {}]
  %s3 = inlined_call_operand.hbm [shape: bf16[128,128], index: 3, kind: input, shape index: {}]
  %s4 = inlined_call_operand.vmem [shape: f32[1,128], index: 4, kind: input, shape index: {}]
  %s5 = inlined_call_operand.hbm [shape: bf16[128,128], index: 5, kind: input, shape index: {}]
  %s6 = inlined_call_operand.vmem [shape: f32[1,128], index: 6, kind: input, shape index: {}]
  %s7 = inlined_call_operand.hbm [shape: f32[8,128], index: 7, kind: output, shape index: {}]
  %s8 = sld [smem:[#allocation0]]
  $region54: #{tpu_custom_call.1} parent=0
    _
  %s10 = ssub.s32 1, %s8
  %s11 = scalar_select 0, %s10, %s8
  $region1: #{tpu_custom_call.1} parent=0
    #allocation2 [shape = 'u8[32768]{0}', space=vmem, size = 0x8000, scoped, tag = 'input window, operand 0, single buffered']
    #allocation3 [shape = 's32[1]{0}', space=sflag, size = 0x4, scoped, tag = 'scoped memory for tpu_custom_call.1']
    #allocation4 [shape = 's32[1]{0}', space=sflag, size = 0x4, scoped, tag = 'scoped memory for tpu_custom_call.1']
    #allocation5 [shape = 'u8[24576]{0}', space=vmem, size = 0x6000, scoped, tag = 'input window, operand 1, single buffered']
    #allocation6 [shape = 's32[1]{0}', space=sflag, size = 0x4, scoped, tag = 'scoped memory for tpu_custom_call.1']
    #allocation7 [shape = 'u8[32768]{0}', space=vmem, size = 0x8000, scoped, tag = 'input window, operand 3, single buffered']
    #allocation8 [shape = 'u8[32768]{0}', space=vmem, size = 0x8000, scoped, tag = 'input window, operand 5, single buffered']
    #allocation9 [shape = 's32[1]{0}', space=sflag, size = 0x4, scoped, tag = 'scoped memory for tpu_custom_call.1']
    #allocation10 [shape = 'u8[4096]{0}', space=vmem, size = 0x1000, scoped, tag = 'output window, operand 0, single buffered']
    %12 = vsyncpa [#allocation3], 0
    %13 = vsyncpa [#allocation6], 0
    %14 = vsyncpa [#allocation9], 0
    %15 = vsyncpa [#allocation4], 0
    // Predicated region
    $region2: #{tpu_custom_call.1} parent=1 // pred_check
      _
    $region3: #{tpu_custom_call.1} parent=1 // pred_check_branch
      %17 = sbr.rel (0) target = $region5
    $region4: #{tpu_custom_call.1} parent=1 // pred_region
      %s19 = ssub.s32 1024, 1024
      %20 = vsyncadd [#allocation3], %s19
      %s21 = sshll.u32 [#allocation2], 4
      %s22 = int_to_ptr.vmem [resolvable:$true] %s21
      %27 = dma.hbm_to_vmem [thread:$0]  %s0, 1024, %s22, [#allocation3], 64, 64, 4
    $region5: #{tpu_custom_call.1} parent=1 // pred_fallthru
      _
    // Predicated region
    $region6: #{tpu_custom_call.1} parent=1 // pred_check
      _
    $region7: #{tpu_custom_call.1} parent=1 // pred_check_branch
      %29 = sbr.rel (0) target = $region9
    $region8: #{tpu_custom_call.1} parent=1 // pred_region
      %s31 = ssub.s32 768, 768
      %32 = vsyncadd [#allocation6], %s31
      %s33 = sshll.u32 [#allocation5], 4
      %s34 = int_to_ptr.vmem [resolvable:$true] %s33
      %39 = dma.hbm_to_vmem [thread:$0]  %s1, 768, %s34, [#allocation6], 64, 64, 4
    $region9: #{tpu_custom_call.1} parent=1 // pred_fallthru
      _
    // Predicated region
    $region10: #{tpu_custom_call.1} parent=1 // pred_check
      _
    $region11: #{tpu_custom_call.1} parent=1 // pred_check_branch
      %41 = sbr.rel (0) target = $region13
    $region12: #{tpu_custom_call.1} parent=1 // pred_region
      _
    $region13: #{tpu_custom_call.1} parent=1 // pred_fallthru
      _
    // Predicated region
    $region14: #{tpu_custom_call.1} parent=1 // pred_check
      _
    $region15: #{tpu_custom_call.1} parent=1 // pred_check_branch
      %43 = sbr.rel (0) target = $region17
    $region16: #{tpu_custom_call.1} parent=1 // pred_region
      %s45 = ssub.s32 1024, 1024
      %46 = vsyncadd [#allocation6], %s45
      %s47 = sshll.u32 [#allocation7], 4
      %s48 = int_to_ptr.vmem [resolvable:$true] %s47
      %53 = dma.hbm_to_vmem [thread:$0]  %s3, 1024, %s48, [#allocation6], 64, 64, 4
    $region17: #{tpu_custom_call.1} parent=1 // pred_fallthru
      _
    // Predicated region
    $region18: #{tpu_custom_call.1} parent=1 // pred_check
      _
    $region19: #{tpu_custom_call.1} parent=1 // pred_check_branch
      %55 = sbr.rel (0) target = $region21
    $region20: #{tpu_custom_call.1} parent=1 // pred_region
      _
    $region21: #{tpu_custom_call.1} parent=1 // pred_fallthru
      _
    // Predicated region
    $region22: #{tpu_custom_call.1} parent=1 // pred_check
      _
    $region23: #{tpu_custom_call.1} parent=1 // pred_check_branch
      %57 = sbr.rel (0) target = $region25
    $region24: #{tpu_custom_call.1} parent=1 // pred_region
      %s59 = ssub.s32 1024, 1024
      %60 = vsyncadd [#allocation9], %s59
      %s61 = sshll.u32 [#allocation8], 4
      %s62 = int_to_ptr.vmem [resolvable:$true] %s61
      %67 = dma.hbm_to_vmem [thread:$0]  %s5, 1024, %s62, [#allocation9], 64, 64, 4
    $region25: #{tpu_custom_call.1} parent=1 // pred_fallthru
      _
    // Predicated region
    $region26: #{tpu_custom_call.1} parent=1 // pred_check
      _
    $region27: #{tpu_custom_call.1} parent=1 // pred_check_branch
      %69 = sbr.rel (0) target = $region29
    $region28: #{tpu_custom_call.1} parent=1 // pred_region
      _
    $region29: #{tpu_custom_call.1} parent=1 // pred_fallthru
      _
    // Predicated region
    $region30: #{tpu_custom_call.1} parent=1 // pred_check
      _
    $region31: #{tpu_custom_call.1} parent=1 // pred_check_branch
      %71 = sbr.rel (0) target = $region33
    $region32: #{tpu_custom_call.1} parent=1 // pred_region
      %72 = dma.done [#allocation3], 1024
    $region33: #{tpu_custom_call.1} parent=1 // pred_fallthru
      _
    // Predicated region
    $region34: #{tpu_custom_call.1} parent=1 // pred_check
      _
    $region35: #{tpu_custom_call.1} parent=1 // pred_check_branch
      %74 = sbr.rel (0) target = $region37
    $region36: #{tpu_custom_call.1} parent=1 // pred_region
      %75 = dma.done [#allocation6], 768
    $region37: #{tpu_custom_call.1} parent=1 // pred_fallthru
      _
    // Predicated region
    $region38: #{tpu_custom_call.1} parent=1 // pred_check
      _
    $region39: #{tpu_custom_call.1} parent=1 // pred_check_branch
      %77 = sbr.rel (0) target = $region41
    $region40: #{tpu_custom_call.1} parent=1 // pred_region
      %78 = dma.done [#allocation6], 1024
    $region41: #{tpu_custom_call.1} parent=1 // pred_fallthru
      _
    // Predicated region
    $region42: #{tpu_custom_call.1} parent=1 // pred_check
      _
    $region43: #{tpu_custom_call.1} parent=1 // pred_check_branch
      %80 = sbr.rel (0) target = $region45
    $region44: #{tpu_custom_call.1} parent=1 // pred_region
      %81 = dma.done [#allocation9], 1024
    $region45: #{tpu_custom_call.1} parent=1 // pred_fallthru
      _
    %v83 = vld [vmem:[#allocation2] sm:$0xf]
    %v84 = vld [vmem:[#allocation2 + $0x4] sm:$0xf]
    %v85 = vld [vmem:[#allocation2 + $0x8] sm:$0xf]
    %v86 = vld [vmem:[#allocation2 + $0xc] sm:$0xf]
    %v87 = vld [vmem:[#allocation2 + $0x10] sm:$0xf]
    %v88 = vld [vmem:[#allocation2 + $0x14] sm:$0xf]
    %v89 = vld [vmem:[#allocation2 + $0x18] sm:$0xf]
    %v90 = vld [vmem:[#allocation2 + $0x1c] sm:$0xf]
    %v91 = vld [vmem:[#allocation2 + $0x20] sm:$0xf]
    %v92 = vld [vmem:[#allocation2 + $0x24] sm:$0xf]
    %v93 = vld [vmem:[#allocation2 + $0x28] sm:$0xf]
    %v94 = vld [vmem:[#allocation2 + $0x2c] sm:$0xf]
    %v95 = vld [vmem:[#allocation2 + $0x30] sm:$0xf]
    %v96 = vld [vmem:[#allocation2 + $0x34] sm:$0xf]
    %v97 = vld [vmem:[#allocation2 + $0x38] sm:$0xf]
    %v98 = vld [vmem:[#allocation2 + $0x3c] sm:$0xf]
    %v115 = vunpack.c.l.b16 %v83
    %v116 = vunpack.c.l.b16 %v84
    %v117 = vunpack.c.l.b16 %v85
    %v118 = vunpack.c.l.b16 %v86
    %v119 = vunpack.c.l.b16 %v87
    %v120 = vunpack.c.l.b16 %v88
    %v121 = vunpack.c.l.b16 %v89
    %v122 = vunpack.c.l.b16 %v90
    %v123 = vunpack.c.l.b16 %v91
    %v124 = vunpack.c.l.b16 %v92
    %v125 = vunpack.c.l.b16 %v93
    %v126 = vunpack.c.l.b16 %v94
    %v127 = vunpack.c.l.b16 %v95
    %v128 = vunpack.c.l.b16 %v96
    %v129 = vunpack.c.l.b16 %v97
    %v130 = vunpack.c.l.b16 %v98
    %v131 = vpack.c.b16 %v116, %v115
    %v132 = vpack.c.b16 %v118, %v117
    %v133 = vpack.c.b16 %v120, %v119
    %v134 = vpack.c.b16 %v122, %v121
    %v135 = vpack.c.b16 %v124, %v123
    %v136 = vpack.c.b16 %v126, %v125
    %v137 = vpack.c.b16 %v128, %v127
    %v138 = vpack.c.b16 %v130, %v129
    %v140 = vshrl.u32 %v131, 16
    %v142 = vshll.u32 %v131, 16
    %v144 = vrot.slane %v142, 1
    %v145 = vor.u32 %v140, %v144
    %v147 = vshrl.u32 %v132, 16
    %v149 = vshll.u32 %v132, 16
    %v151 = vrot.slane %v149, 1
    %v152 = vor.u32 %v147, %v151
    %v154 = vshrl.u32 %v133, 16
    %v156 = vshll.u32 %v133, 16
    %v158 = vrot.slane %v156, 1
    %v159 = vor.u32 %v154, %v158
    %v161 = vshrl.u32 %v134, 16
    %v163 = vshll.u32 %v134, 16
    %v165 = vrot.slane %v163, 1
    %v166 = vor.u32 %v161, %v165
    %v168 = vshrl.u32 %v135, 16
    %v170 = vshll.u32 %v135, 16
    %v172 = vrot.slane %v170, 1
    %v173 = vor.u32 %v168, %v172
    %v175 = vshrl.u32 %v136, 16
    %v177 = vshll.u32 %v136, 16
    %v179 = vrot.slane %v177, 1
    %v180 = vor.u32 %v175, %v179
    %v182 = vshrl.u32 %v137, 16
    %v184 = vshll.u32 %v137, 16
    %v186 = vrot.slane %v184, 1
    %v187 = vor.u32 %v182, %v186
    %v189 = vshrl.u32 %v138, 16
    %v191 = vshll.u32 %v138, 16
    %v193 = vrot.slane %v191, 1
    %v194 = vor.u32 %v189, %v193
    %195 = vrot.lane.b32.xlu0 %v145, 32
    %v196 = vpop.permute.xlu0 %195
    %197 = vrot.lane.b32.xlu0 %v152, 32
    %v198 = vpop.permute.xlu0 %197
    %199 = vrot.lane.b32.xlu0 %v159, 32
    %v200 = vpop.permute.xlu0 %199
    %201 = vrot.lane.b32.xlu0 %v166, 32
    %v202 = vpop.permute.xlu0 %201
    %203 = vrot.lane.b32.xlu0 %v173, 32
    %v204 = vpop.permute.xlu0 %203
    %205 = vrot.lane.b32.xlu0 %v180, 32
    %v206 = vpop.permute.xlu0 %205
    %207 = vrot.lane.b32.xlu0 %v187, 32
    %v208 = vpop.permute.xlu0 %207
    %209 = vrot.lane.b32.xlu0 %v194, 32
    %v210 = vpop.permute.xlu0 %209
    %v211 = vrot.slane %v131, 1
    %v212 = vrot.slane %v132, 1
    %v213 = vrot.slane %v133, 1
    %v214 = vrot.slane %v134, 1
    %v215 = vrot.slane %v135, 1
    %v216 = vrot.slane %v136, 1
    %v217 = vrot.slane %v137, 1
    %v218 = vrot.slane %v138, 1
    %219 = vrot.lane.b32.xlu0 %v211, 64
    %v220 = vpop.permute.xlu0 %219
    %221 = vrot.lane.b32.xlu0 %v212, 64
    %v222 = vpop.permute.xlu0 %221
    %223 = vrot.lane.b32.xlu0 %v213, 64
    %v224 = vpop.permute.xlu0 %223
    %225 = vrot.lane.b32.xlu0 %v214, 64
    %v226 = vpop.permute.xlu0 %225
    %227 = vrot.lane.b32.xlu0 %v215, 64
    %v228 = vpop.permute.xlu0 %227
    %229 = vrot.lane.b32.xlu0 %v216, 64
    %v230 = vpop.permute.xlu0 %229
    %231 = vrot.lane.b32.xlu0 %v217, 64
    %v232 = vpop.permute.xlu0 %231
    %233 = vrot.lane.b32.xlu0 %v218, 64
    %v234 = vpop.permute.xlu0 %233
    %vm235 = vcmask 261120
    %v237 = vsel %vm235, %v131, %v196
    %v239 = vsel %vm235, %v132, %v198
    %v241 = vsel %vm235, %v133, %v200
    %v243 = vsel %vm235, %v134, %v202
    %v245 = vsel %vm235, %v135, %v204
    %v247 = vsel %vm235, %v136, %v206
    %v249 = vsel %vm235, %v137, %v208
    %v251 = vsel %vm235, %v138, %v210
    %vm252 = vcmask 523264
    %v254 = vsel %vm252, %v237, %v220
    %v256 = vsel %vm252, %v239, %v222
    %v258 = vsel %vm252, %v241, %v224
    %v260 = vsel %vm252, %v243, %v226
    %v262 = vsel %vm252, %v245, %v228
    %v264 = vsel %vm252, %v247, %v230
    %v266 = vsel %vm252, %v249, %v232
    %v268 = vsel %vm252, %v251, %v234
    %v269 = vld [vmem:[#allocation5] sm:$0xf]
    %v270 = vld [vmem:[#allocation5 + $0x4] sm:$0xf]
    %v271 = vld [vmem:[#allocation5 + $0x8] sm:$0xf]
    %v272 = vld [vmem:[#allocation5 + $0xc] sm:$0xf]
    %v273 = vld [vmem:[#allocation5 + $0x10] sm:$0xf]
    %v274 = vld [vmem:[#allocation5 + $0x14] sm:$0xf]
    %v275 = vld [vmem:[#allocation5 + $0x18] sm:$0xf]
    %v276 = vld [vmem:[#allocation5 + $0x1c] sm:$0xf]
    %v277 = vld [vmem:[#allocation5 + $0x20] sm:$0xf]
    %v278 = vld [vmem:[#allocation5 + $0x24] sm:$0xf]
    %v279 = vld [vmem:[#allocation5 + $0x28] sm:$0xf]
    %v280 = vld [vmem:[#allocation5 + $0x2c] sm:$0xf]
    %v281 = vld [vmem:[%s2] sm:$0x1]
    %v283 = vlaneseq
    %v284 = vshrl.u32 %v283, 7
    %v285 = vsub.s32 0, %v284
    %v286 = vrot.slane %v281, %v285
    %v295 = vcombine.high %v254, %v254
    %v297 = vunpack.c.l.s4 1966171168
    %v298 = vunpack.c.0.s8 %v297
    %v299 = vlaneseq
    %v300 = vshrl.u32 %v299, 7
    %v301 = vsub.s32 %v298, %v300
    %v302 = vrot.slane %v254, %v301
    %v304 = vunpack.c.l.s4 1966171168
    %v305 = vunpack.c.0.s8 %v304
    %v306 = vlaneseq
    %v307 = vshrl.u32 %v306, 7
    %v308 = vsub.s32 %v305, %v307
    %v309 = vrot.slane %v295, %v308
    %v310 = vcombine.high %v302, %v302
    %v311 = vcombine.high %v309, %v309
    %v313 = vunpack.c.l.s4 1966171168
    %v314 = vunpack.c.0.s8 %v313
    %v315 = vlaneseq
    %v316 = vshrl.u32 %v315, 7
    %v317 = vsub.s32 %v314, %v316
    %v318 = vrot.slane %v302, %v317
    %v320 = vunpack.c.l.s4 1966171168
    %v321 = vunpack.c.0.s8 %v320
    %v322 = vlaneseq
    %v323 = vshrl.u32 %v322, 7
    %v324 = vsub.s32 %v321, %v323
    %v325 = vrot.slane %v309, %v324
    %v327 = vunpack.c.l.s4 1966171168
    %v328 = vunpack.c.0.s8 %v327
    %v329 = vlaneseq
    %v330 = vshrl.u32 %v329, 7
    %v331 = vsub.s32 %v328, %v330
    %v332 = vrot.slane %v310, %v331
    %v334 = vunpack.c.l.s4 1966171168
    %v335 = vunpack.c.0.s8 %v334
    %v336 = vlaneseq
    %v337 = vshrl.u32 %v336, 7
    %v338 = vsub.s32 %v335, %v337
    %v339 = vrot.slane %v311, %v338
    %v340 = vcombine.high %v318, %v318
    %v341 = vcombine.high %v325, %v325
    %v342 = vcombine.high %v332, %v332
    %v343 = vcombine.high %v256, %v256
    %v345 = vunpack.c.l.s4 1966171168
    %v346 = vunpack.c.0.s8 %v345
    %v347 = vlaneseq
    %v348 = vshrl.u32 %v347, 7
    %v349 = vsub.s32 %v346, %v348
    %v350 = vrot.slane %v256, %v349
    %v352 = vunpack.c.l.s4 1966171168
    %v353 = vunpack.c.0.s8 %v352
    %v354 = vlaneseq
    %v355 = vshrl.u32 %v354, 7
    %v356 = vsub.s32 %v353, %v355
    %v357 = vrot.slane %v343, %v356
    %v358 = vcombine.high %v350, %v350
    %v359 = vcombine.high %v357, %v357
    %v361 = vunpack.c.l.s4 1966171168
    %v362 = vunpack.c.0.s8 %v361
    %v363 = vlaneseq
    %v364 = vshrl.u32 %v363, 7
    %v365 = vsub.s32 %v362, %v364
    %v366 = vrot.slane %v350, %v365
    %v368 = vunpack.c.l.s4 1966171168
    %v369 = vunpack.c.0.s8 %v368
    %v370 = vlaneseq
    %v371 = vshrl.u32 %v370, 7
    %v372 = vsub.s32 %v369, %v371
    %v373 = vrot.slane %v357, %v372
    %v375 = vunpack.c.l.s4 1966171168
    %v376 = vunpack.c.0.s8 %v375
    %v377 = vlaneseq
    %v378 = vshrl.u32 %v377, 7
    %v379 = vsub.s32 %v376, %v378
    %v380 = vrot.slane %v358, %v379
    %v382 = vunpack.c.l.s4 1966171168
    %v383 = vunpack.c.0.s8 %v382
    %v384 = vlaneseq
    %v385 = vshrl.u32 %v384, 7
    %v386 = vsub.s32 %v383, %v385
    %v387 = vrot.slane %v359, %v386
    %v388 = vcombine.high %v366, %v366
    %v389 = vcombine.high %v373, %v373
    %v390 = vcombine.high %v380, %v380
    %v391 = vcombine.high %v258, %v258
    %v393 = vunpack.c.l.s4 1966171168
    %v394 = vunpack.c.0.s8 %v393
    %v395 = vlaneseq
    %v396 = vshrl.u32 %v395, 7
    %v397 = vsub.s32 %v394, %v396
    %v398 = vrot.slane %v258, %v397
    %v400 = vunpack.c.l.s4 1966171168
    %v401 = vunpack.c.0.s8 %v400
    %v402 = vlaneseq
    %v403 = vshrl.u32 %v402, 7
    %v404 = vsub.s32 %v401, %v403
    %v405 = vrot.slane %v391, %v404
    %v406 = vcombine.high %v398, %v398
    %v407 = vcombine.high %v405, %v405
    %v409 = vunpack.c.l.s4 1966171168
    %v410 = vunpack.c.0.s8 %v409
    %v411 = vlaneseq
    %v412 = vshrl.u32 %v411, 7
    %v413 = vsub.s32 %v410, %v412
    %v414 = vrot.slane %v398, %v413
    %v416 = vunpack.c.l.s4 1966171168
    %v417 = vunpack.c.0.s8 %v416
    %v418 = vlaneseq
    %v419 = vshrl.u32 %v418, 7
    %v420 = vsub.s32 %v417, %v419
    %v421 = vrot.slane %v405, %v420
    %v423 = vunpack.c.l.s4 1966171168
    %v424 = vunpack.c.0.s8 %v423
    %v425 = vlaneseq
    %v426 = vshrl.u32 %v425, 7
    %v427 = vsub.s32 %v424, %v426
    %v428 = vrot.slane %v406, %v427
    %v430 = vunpack.c.l.s4 1966171168
    %v431 = vunpack.c.0.s8 %v430
    %v432 = vlaneseq
    %v433 = vshrl.u32 %v432, 7
    %v434 = vsub.s32 %v431, %v433
    %v435 = vrot.slane %v407, %v434
    %v436 = vcombine.high %v414, %v414
    %v437 = vcombine.high %v421, %v421
    %v438 = vcombine.high %v428, %v428
    %v439 = vcombine.high %v260, %v260
    %v441 = vunpack.c.l.s4 1966171168
    %v442 = vunpack.c.0.s8 %v441
    %v443 = vlaneseq
    %v444 = vshrl.u32 %v443, 7
    %v445 = vsub.s32 %v442, %v444
    %v446 = vrot.slane %v260, %v445
    %v448 = vunpack.c.l.s4 1966171168
    %v449 = vunpack.c.0.s8 %v448
    %v450 = vlaneseq
    %v451 = vshrl.u32 %v450, 7
    %v452 = vsub.s32 %v449, %v451
    %v453 = vrot.slane %v439, %v452
    %v454 = vcombine.high %v446, %v446
    %v455 = vcombine.high %v453, %v453
    %v457 = vunpack.c.l.s4 1966171168
    %v458 = vunpack.c.0.s8 %v457
    %v459 = vlaneseq
    %v460 = vshrl.u32 %v459, 7
    %v461 = vsub.s32 %v458, %v460
    %v462 = vrot.slane %v446, %v461
    %v464 = vunpack.c.l.s4 1966171168
    %v465 = vunpack.c.0.s8 %v464
    %v466 = vlaneseq
    %v467 = vshrl.u32 %v466, 7
    %v468 = vsub.s32 %v465, %v467
    %v469 = vrot.slane %v453, %v468
    %v471 = vunpack.c.l.s4 1966171168
    %v472 = vunpack.c.0.s8 %v471
    %v473 = vlaneseq
    %v474 = vshrl.u32 %v473, 7
    %v475 = vsub.s32 %v472, %v474
    %v476 = vrot.slane %v454, %v475
    %v478 = vunpack.c.l.s4 1966171168
    %v479 = vunpack.c.0.s8 %v478
    %v480 = vlaneseq
    %v481 = vshrl.u32 %v480, 7
    %v482 = vsub.s32 %v479, %v481
    %v483 = vrot.slane %v455, %v482
    %v484 = vcombine.high %v462, %v462
    %v485 = vcombine.high %v469, %v469
    %v486 = vcombine.high %v476, %v476
    %v487 = vcombine.high %v262, %v262
    %v489 = vunpack.c.l.s4 1966171168
    %v490 = vunpack.c.0.s8 %v489
    %v491 = vlaneseq
    %v492 = vshrl.u32 %v491, 7
    %v493 = vsub.s32 %v490, %v492
    %v494 = vrot.slane %v262, %v493
    %v496 = vunpack.c.l.s4 1966171168
    %v497 = vunpack.c.0.s8 %v496
    %v498 = vlaneseq
    %v499 = vshrl.u32 %v498, 7
    %v500 = vsub.s32 %v497, %v499
    %v501 = vrot.slane %v487, %v500
    %v502 = vcombine.high %v494, %v494
    %v503 = vcombine.high %v501, %v501
    %v505 = vunpack.c.l.s4 1966171168
    %v506 = vunpack.c.0.s8 %v505
    %v507 = vlaneseq
    %v508 = vshrl.u32 %v507, 7
    %v509 = vsub.s32 %v506, %v508
    %v510 = vrot.slane %v494, %v509
    %v512 = vunpack.c.l.s4 1966171168
    %v513 = vunpack.c.0.s8 %v512
    %v514 = vlaneseq
    %v515 = vshrl.u32 %v514, 7
    %v516 = vsub.s32 %v513, %v515
    %v517 = vrot.slane %v501, %v516
    %v519 = vunpack.c.l.s4 1966171168
    %v520 = vunpack.c.0.s8 %v519
    %v521 = vlaneseq
    %v522 = vshrl.u32 %v521, 7
    %v523 = vsub.s32 %v520, %v522
    %v524 = vrot.slane %v502, %v523
    %v526 = vunpack.c.l.s4 1966171168
    %v527 = vunpack.c.0.s8 %v526
    %v528 = vlaneseq
    %v529 = vshrl.u32 %v528, 7
    %v530 = vsub.s32 %v527, %v529
    %v531 = vrot.slane %v503, %v530
    %v532 = vcombine.high %v510, %v510
    %v533 = vcombine.high %v517, %v517
    %v534 = vcombine.high %v524, %v524
    %v535 = vcombine.high %v264, %v264
    %v537 = vunpack.c.l.s4 1966171168
    %v538 = vunpack.c.0.s8 %v537
    %v539 = vlaneseq
    %v540 = vshrl.u32 %v539, 7
    %v541 = vsub.s32 %v538, %v540
    %v542 = vrot.slane %v264, %v541
    %v544 = vunpack.c.l.s4 1966171168
    %v545 = vunpack.c.0.s8 %v544
    %v546 = vlaneseq
    %v547 = vshrl.u32 %v546, 7
    %v548 = vsub.s32 %v545, %v547
    %v549 = vrot.slane %v535, %v548
    %v550 = vcombine.high %v542, %v542
    %v551 = vcombine.high %v549, %v549
    %v553 = vunpack.c.l.s4 1966171168
    %v554 = vunpack.c.0.s8 %v553
    %v555 = vlaneseq
    %v556 = vshrl.u32 %v555, 7
    %v557 = vsub.s32 %v554, %v556
    %v558 = vrot.slane %v542, %v557
    %v560 = vunpack.c.l.s4 1966171168
    %v561 = vunpack.c.0.s8 %v560
    %v562 = vlaneseq
    %v563 = vshrl.u32 %v562, 7
    %v564 = vsub.s32 %v561, %v563
    %v565 = vrot.slane %v549, %v564
    %v567 = vunpack.c.l.s4 1966171168
    %v568 = vunpack.c.0.s8 %v567
    %v569 = vlaneseq
    %v570 = vshrl.u32 %v569, 7
    %v571 = vsub.s32 %v568, %v570
    %v572 = vrot.slane %v550, %v571
    %v574 = vunpack.c.l.s4 1966171168
    %v575 = vunpack.c.0.s8 %v574
    %v576 = vlaneseq
    %v577 = vshrl.u32 %v576, 7
    %v578 = vsub.s32 %v575, %v577
    %v579 = vrot.slane %v551, %v578
    %v580 = vcombine.high %v558, %v558
    %v581 = vcombine.high %v565, %v565
    %v582 = vcombine.high %v572, %v572
    %v583 = vcombine.high %v266, %v266
    %v585 = vunpack.c.l.s4 1966171168
    %v586 = vunpack.c.0.s8 %v585
    %v587 = vlaneseq
    %v588 = vshrl.u32 %v587, 7
    %v589 = vsub.s32 %v586, %v588
    %v590 = vrot.slane %v266, %v589
    %v592 = vunpack.c.l.s4 1966171168
    %v593 = vunpack.c.0.s8 %v592
    %v594 = vlaneseq
    %v595 = vshrl.u32 %v594, 7
    %v596 = vsub.s32 %v593, %v595
    %v597 = vrot.slane %v583, %v596
    %v598 = vcombine.high %v590, %v590
    %v599 = vcombine.high %v597, %v597
    %v601 = vunpack.c.l.s4 1966171168
    %v602 = vunpack.c.0.s8 %v601
    %v603 = vlaneseq
    %v604 = vshrl.u32 %v603, 7
    %v605 = vsub.s32 %v602, %v604
    %v606 = vrot.slane %v590, %v605
    %v608 = vunpack.c.l.s4 1966171168
    %v609 = vunpack.c.0.s8 %v608
    %v610 = vlaneseq
    %v611 = vshrl.u32 %v610, 7
    %v612 = vsub.s32 %v609, %v611
    %v613 = vrot.slane %v597, %v612
    %v615 = vunpack.c.l.s4 1966171168
    %v616 = vunpack.c.0.s8 %v615
    %v617 = vlaneseq
    %v618 = vshrl.u32 %v617, 7
    %v619 = vsub.s32 %v616, %v618
    %v620 = vrot.slane %v598, %v619
    %v622 = vunpack.c.l.s4 1966171168
    %v623 = vunpack.c.0.s8 %v622
    %v624 = vlaneseq
    %v625 = vshrl.u32 %v624, 7
    %v626 = vsub.s32 %v623, %v625
    %v627 = vrot.slane %v599, %v626
    %v628 = vcombine.high %v606, %v606
    %v629 = vcombine.high %v613, %v613
    %v630 = vcombine.high %v620, %v620
    %v631 = vcombine.high %v268, %v268
    %v633 = vunpack.c.l.s4 1966171168
    %v634 = vunpack.c.0.s8 %v633
    %v635 = vlaneseq
    %v636 = vshrl.u32 %v635, 7
    %v637 = vsub.s32 %v634, %v636
    %v638 = vrot.slane %v268, %v637
    %v640 = vunpack.c.l.s4 1966171168
    %v641 = vunpack.c.0.s8 %v640
    %v642 = vlaneseq
    %v643 = vshrl.u32 %v642, 7
    %v644 = vsub.s32 %v641, %v643
    %v645 = vrot.slane %v631, %v644
    %v646 = vcombine.high %v638, %v638
    %v647 = vcombine.high %v645, %v645
    %v649 = vunpack.c.l.s4 1966171168
    %v650 = vunpack.c.0.s8 %v649
    %v651 = vlaneseq
    %v652 = vshrl.u32 %v651, 7
    %v653 = vsub.s32 %v650, %v652
    %v654 = vrot.slane %v638, %v653
    %v656 = vunpack.c.l.s4 1966171168
    %v657 = vunpack.c.0.s8 %v656
    %v658 = vlaneseq
    %v659 = vshrl.u32 %v658, 7
    %v660 = vsub.s32 %v657, %v659
    %v661 = vrot.slane %v645, %v660
    %v663 = vunpack.c.l.s4 1966171168
    %v664 = vunpack.c.0.s8 %v663
    %v665 = vlaneseq
    %v666 = vshrl.u32 %v665, 7
    %v667 = vsub.s32 %v664, %v666
    %v668 = vrot.slane %v646, %v667
    %v670 = vunpack.c.l.s4 1966171168
    %v671 = vunpack.c.0.s8 %v670
    %v672 = vlaneseq
    %v673 = vshrl.u32 %v672, 7
    %v674 = vsub.s32 %v671, %v673
    %v675 = vrot.slane %v647, %v674
    %v676 = vcombine.high %v654, %v654
    %v677 = vcombine.high %v661, %v661
    %v678 = vcombine.high %v668, %v668
    %v679 = vcombine.high %v286, %v286
    %v681 = vunpack.c.l.s4 1983009808
    %v682 = vunpack.c.0.s8 %v681
    %v683 = vlaneseq
    %v684 = vshrl.u32 %v683, 7
    %v685 = vsub.s32 %v682, %v684
    %v686 = vrot.slane %v286, %v685
    %v688 = vunpack.c.l.s4 1983009808
    %v689 = vunpack.c.0.s8 %v688
    %v690 = vlaneseq
    %v691 = vshrl.u32 %v690, 7
    %v692 = vsub.s32 %v689, %v691
    %v693 = vrot.slane %v679, %v692
    %v694 = vcombine.high %v686, %v686
    %v695 = vcombine.high %v693, %v693
    %v696 = vcombine.low %v318, %v332
    %v697 = vcombine.low %v340, %v342
    %v698 = vcombine.low %v325, %v339
    %v699 = vcombine.low %v341, %v366
    %v701 = vunpack.c.l.s4 1966171168
    %v702 = vunpack.c.0.s8 %v701
    %v703 = vlaneseq
    %v704 = vshrl.u32 %v703, 7
    %v705 = vsub.s32 %v702, %v704
    %v706 = vrot.slane %v696, %v705
    %v708 = vunpack.c.l.s4 1966171168
    %v709 = vunpack.c.0.s8 %v708
    %v710 = vlaneseq
    %v711 = vshrl.u32 %v710, 7
    %v712 = vsub.s32 %v709, %v711
    %v713 = vrot.slane %v697, %v712
    %v715 = vunpack.c.l.s4 1966171168
    %v716 = vunpack.c.0.s8 %v715
    %v717 = vlaneseq
    %v718 = vshrl.u32 %v717, 7
    %v719 = vsub.s32 %v716, %v718
    %v720 = vrot.slane %v698, %v719
    %v722 = vunpack.c.l.s4 1966171168
    %v723 = vunpack.c.0.s8 %v722
    %v724 = vlaneseq
    %v725 = vshrl.u32 %v724, 7
    %v726 = vsub.s32 %v723, %v725
    %v727 = vrot.slane %v699, %v726
    %v728 = vcombine.low %v706, %v713
    %v729 = vcombine.low %v720, %v727
    %v731 = vunpack.c.l.s4 1966171168
    %v732 = vunpack.c.0.s8 %v731
    %v733 = vlaneseq
    %v734 = vshrl.u32 %v733, 7
    %v735 = vsub.s32 %v732, %v734
    %v736 = vrot.slane %v728, %v735
    %v738 = vunpack.c.l.s4 1966171168
    %v739 = vunpack.c.0.s8 %v738
    %v740 = vlaneseq
    %v741 = vshrl.u32 %v740, 7
    %v742 = vsub.s32 %v739, %v741
    %v743 = vrot.slane %v729, %v742
    %v744 = vcombine.low %v736, %v743
    %v745 = vcombine.low %v380, %v388
    %v746 = vcombine.low %v390, %v373
    %v747 = vcombine.low %v387, %v389
    %v748 = vcombine.low %v414, %v428
    %v750 = vunpack.c.l.s4 1966171168
    %v751 = vunpack.c.0.s8 %v750
    %v752 = vlaneseq
    %v753 = vshrl.u32 %v752, 7
    %v754 = vsub.s32 %v751, %v753
    %v755 = vrot.slane %v745, %v754
    %v757 = vunpack.c.l.s4 1966171168
    %v758 = vunpack.c.0.s8 %v757
    %v759 = vlaneseq
    %v760 = vshrl.u32 %v759, 7
    %v761 = vsub.s32 %v758, %v760
    %v762 = vrot.slane %v746, %v761
    %v764 = vunpack.c.l.s4 1966171168
    %v765 = vunpack.c.0.s8 %v764
    %v766 = vlaneseq
    %v767 = vshrl.u32 %v766, 7
    %v768 = vsub.s32 %v765, %v767
    %v769 = vrot.slane %v747, %v768
    %v771 = vunpack.c.l.s4 1966171168
    %v772 = vunpack.c.0.s8 %v771
    %v773 = vlaneseq
    %v774 = vshrl.u32 %v773, 7
    %v775 = vsub.s32 %v772, %v774
    %v776 = vrot.slane %v748, %v775
    %v777 = vcombine.low %v755, %v762
    %v778 = vcombine.low %v769, %v776
    %v780 = vunpack.c.l.s4 1966171168
    %v781 = vunpack.c.0.s8 %v780
    %v782 = vlaneseq
    %v783 = vshrl.u32 %v782, 7
    %v784 = vsub.s32 %v781, %v783
    %v785 = vrot.slane %v777, %v784
    %v787 = vunpack.c.l.s4 1966171168
    %v788 = vunpack.c.0.s8 %v787
    %v789 = vlaneseq
    %v790 = vshrl.u32 %v789, 7
    %v791 = vsub.s32 %v788, %v790
    %v792 = vrot.slane %v778, %v791
    %v793 = vcombine.low %v785, %v792
    %v794 = vcombine.low %v436, %v438
    %v795 = vcombine.low %v421, %v435
    %v796 = vcombine.low %v437, %v462
    %v797 = vcombine.low %v476, %v484
    %v799 = vunpack.c.l.s4 1966171168
    %v800 = vunpack.c.0.s8 %v799
    %v801 = vlaneseq
    %v802 = vshrl.u32 %v801, 7
    %v803 = vsub.s32 %v800, %v802
    %v804 = vrot.slane %v794, %v803
    %v806 = vunpack.c.l.s4 1966171168
    %v807 = vunpack.c.0.s8 %v806
    %v808 = vlaneseq
    %v809 = vshrl.u32 %v808, 7
    %v810 = vsub.s32 %v807, %v809
    %v811 = vrot.slane %v795, %v810
    %v813 = vunpack.c.l.s4 1966171168
    %v814 = vunpack.c.0.s8 %v813
    %v815 = vlaneseq
    %v816 = vshrl.u32 %v815, 7
    %v817 = vsub.s32 %v814, %v816
    %v818 = vrot.slane %v796, %v817
    %v820 = vunpack.c.l.s4 1966171168
    %v821 = vunpack.c.0.s8 %v820
    %v822 = vlaneseq
    %v823 = vshrl.u32 %v822, 7
    %v824 = vsub.s32 %v821, %v823
    %v825 = vrot.slane %v797, %v824
    %v826 = vcombine.low %v804, %v811
    %v827 = vcombine.low %v818, %v825
    %v829 = vunpack.c.l.s4 1966171168
    %v830 = vunpack.c.0.s8 %v829
    %v831 = vlaneseq
    %v832 = vshrl.u32 %v831, 7
    %v833 = vsub.s32 %v830, %v832
    %v834 = vrot.slane %v826, %v833
    %v836 = vunpack.c.l.s4 1966171168
    %v837 = vunpack.c.0.s8 %v836
    %v838 = vlaneseq
    %v839 = vshrl.u32 %v838, 7
    %v840 = vsub.s32 %v837, %v839
    %v841 = vrot.slane %v827, %v840
    %v842 = vcombine.low %v834, %v841
    %v843 = vcombine.low %v486, %v469
    %v844 = vcombine.low %v483, %v485
    %v845 = vcombine.low %v510, %v524
    %v846 = vcombine.low %v532, %v534
    %v848 = vunpack.c.l.s4 1966171168
    %v849 = vunpack.c.0.s8 %v848
    %v850 = vlaneseq
    %v851 = vshrl.u32 %v850, 7
    %v852 = vsub.s32 %v849, %v851
    %v853 = vrot.slane %v843, %v852
    %v855 = vunpack.c.l.s4 1966171168
    %v856 = vunpack.c.0.s8 %v855
    %v857 = vlaneseq
    %v858 = vshrl.u32 %v857, 7
    %v859 = vsub.s32 %v856, %v858
    %v860 = vrot.slane %v844, %v859
    %v862 = vunpack.c.l.s4 1966171168
    %v863 = vunpack.c.0.s8 %v862
    %v864 = vlaneseq
    %v865 = vshrl.u32 %v864, 7
    %v866 = vsub.s32 %v863, %v865
    %v867 = vrot.slane %v845, %v866
    %v869 = vunpack.c.l.s4 1966171168
    %v870 = vunpack.c.0.s8 %v869
    %v871 = vlaneseq
    %v872 = vshrl.u32 %v871, 7
    %v873 = vsub.s32 %v870, %v872
    %v874 = vrot.slane %v846, %v873
    %v875 = vcombine.low %v853, %v860
    %v876 = vcombine.low %v867, %v874
    %v878 = vunpack.c.l.s4 1966171168
    %v879 = vunpack.c.0.s8 %v878
    %v880 = vlaneseq
    %v881 = vshrl.u32 %v880, 7
    %v882 = vsub.s32 %v879, %v881
    %v883 = vrot.slane %v875, %v882
    %v885 = vunpack.c.l.s4 1966171168
    %v886 = vunpack.c.0.s8 %v885
    %v887 = vlaneseq
    %v888 = vshrl.u32 %v887, 7
    %v889 = vsub.s32 %v886, %v888
    %v890 = vrot.slane %v876, %v889
    %v891 = vcombine.low %v883, %v890
    %v892 = vcombine.low %v517, %v531
    %v893 = vcombine.low %v533, %v558
    %v894 = vcombine.low %v572, %v580
    %v895 = vcombine.low %v582, %v565
    %v897 = vunpack.c.l.s4 1966171168
    %v898 = vunpack.c.0.s8 %v897
    %v899 = vlaneseq
    %v900 = vshrl.u32 %v899, 7
    %v901 = vsub.s32 %v898, %v900
    %v902 = vrot.slane %v892, %v901
    %v904 = vunpack.c.l.s4 1966171168
    %v905 = vunpack.c.0.s8 %v904
    %v906 = vlaneseq
    %v907 = vshrl.u32 %v906, 7
    %v908 = vsub.s32 %v905, %v907
    %v909 = vrot.slane %v893, %v908
    %v911 = vunpack.c.l.s4 1966171168
    %v912 = vunpack.c.0.s8 %v911
    %v913 = vlaneseq
    %v914 = vshrl.u32 %v913, 7
    %v915 = vsub.s32 %v912, %v914
    %v916 = vrot.slane %v894, %v915
    %v918 = vunpack.c.l.s4 1966171168
    %v919 = vunpack.c.0.s8 %v918
    %v920 = vlaneseq
    %v921 = vshrl.u32 %v920, 7
    %v922 = vsub.s32 %v919, %v921
    %v923 = vrot.slane %v895, %v922
    %v924 = vcombine.low %v902, %v909
    %v925 = vcombine.low %v916, %v923
    %v927 = vunpack.c.l.s4 1966171168
    %v928 = vunpack.c.0.s8 %v927
    %v929 = vlaneseq
    %v930 = vshrl.u32 %v929, 7
    %v931 = vsub.s32 %v928, %v930
    %v932 = vrot.slane %v924, %v931
    %v934 = vunpack.c.l.s4 1966171168
    %v935 = vunpack.c.0.s8 %v934
    %v936 = vlaneseq
    %v937 = vshrl.u32 %v936, 7
    %v938 = vsub.s32 %v935, %v937
    %v939 = vrot.slane %v925, %v938
    %v940 = vcombine.low %v932, %v939
    %v941 = vcombine.low %v579, %v581
    %v942 = vcombine.low %v606, %v620
    %v943 = vcombine.low %v628, %v630
    %v944 = vcombine.low %v613, %v627
    %v946 = vunpack.c.l.s4 1966171168
    %v947 = vunpack.c.0.s8 %v946
    %v948 = vlaneseq
    %v949 = vshrl.u32 %v948, 7
    %v950 = vsub.s32 %v947, %v949
    %v951 = vrot.slane %v941, %v950
    %v953 = vunpack.c.l.s4 1966171168
    %v954 = vunpack.c.0.s8 %v953
    %v955 = vlaneseq
    %v956 = vshrl.u32 %v955, 7
    %v957 = vsub.s32 %v954, %v956
    %v958 = vrot.slane %v942, %v957
    %v960 = vunpack.c.l.s4 1966171168
    %v961 = vunpack.c.0.s8 %v960
    %v962 = vlaneseq
    %v963 = vshrl.u32 %v962, 7
    %v964 = vsub.s32 %v961, %v963
    %v965 = vrot.slane %v943, %v964
    %v967 = vunpack.c.l.s4 1966171168
    %v968 = vunpack.c.0.s8 %v967
    %v969 = vlaneseq
    %v970 = vshrl.u32 %v969, 7
    %v971 = vsub.s32 %v968, %v970
    %v972 = vrot.slane %v944, %v971
    %v973 = vcombine.low %v951, %v958
    %v974 = vcombine.low %v965, %v972
    %v976 = vunpack.c.l.s4 1966171168
    %v977 = vunpack.c.0.s8 %v976
    %v978 = vlaneseq
    %v979 = vshrl.u32 %v978, 7
    %v980 = vsub.s32 %v977, %v979
    %v981 = vrot.slane %v973, %v980
    %v983 = vunpack.c.l.s4 1966171168
    %v984 = vunpack.c.0.s8 %v983
    %v985 = vlaneseq
    %v986 = vshrl.u32 %v985, 7
    %v987 = vsub.s32 %v984, %v986
    %v988 = vrot.slane %v974, %v987
    %v989 = vcombine.low %v981, %v988
    %v990 = vcombine.low %v629, %v654
    %v991 = vcombine.low %v668, %v676
    %v992 = vcombine.low %v678, %v661
    %v993 = vcombine.low %v675, %v677
    %v995 = vunpack.c.l.s4 1966171168
    %v996 = vunpack.c.0.s8 %v995
    %v997 = vlaneseq
    %v998 = vshrl.u32 %v997, 7
    %v999 = vsub.s32 %v996, %v998
    %v1000 = vrot.slane %v990, %v999
    %v1002 = vunpack.c.l.s4 1966171168
    %v1003 = vunpack.c.0.s8 %v1002
    %v1004 = vlaneseq
    %v1005 = vshrl.u32 %v1004, 7
    %v1006 = vsub.s32 %v1003, %v1005
    %v1007 = vrot.slane %v991, %v1006
    %v1009 = vunpack.c.l.s4 1966171168
    %v1010 = vunpack.c.0.s8 %v1009
    %v1011 = vlaneseq
    %v1012 = vshrl.u32 %v1011, 7
    %v1013 = vsub.s32 %v1010, %v1012
    %v1014 = vrot.slane %v992, %v1013
    %v1016 = vunpack.c.l.s4 1966171168
    %v1017 = vunpack.c.0.s8 %v1016
    %v1018 = vlaneseq
    %v1019 = vshrl.u32 %v1018, 7
    %v1020 = vsub.s32 %v1017, %v1019
    %v1021 = vrot.slane %v993, %v1020
    %v1022 = vcombine.low %v1000, %v1007
    %v1023 = vcombine.low %v1014, %v1021
    %v1025 = vunpack.c.l.s4 1966171168
    %v1026 = vunpack.c.0.s8 %v1025
    %v1027 = vlaneseq
    %v1028 = vshrl.u32 %v1027, 7
    %v1029 = vsub.s32 %v1026, %v1028
    %v1030 = vrot.slane %v1022, %v1029
    %v1032 = vunpack.c.l.s4 1966171168
    %v1033 = vunpack.c.0.s8 %v1032
    %v1034 = vlaneseq
    %v1035 = vshrl.u32 %v1034, 7
    %v1036 = vsub.s32 %v1033, %v1035
    %v1037 = vrot.slane %v1023, %v1036
    %v1038 = vcombine.low %v1030, %v1037
    %v1051 = vunpack.c.l.b16 %v269
    %v1052 = vunpack.c.l.b16 %v270
    %v1053 = vunpack.c.l.b16 %v271
    %v1054 = vunpack.c.l.b16 %v272
    %v1055 = vunpack.c.l.b16 %v273
    %v1056 = vunpack.c.l.b16 %v274
    %v1057 = vunpack.c.l.b16 %v275
    %v1058 = vunpack.c.l.b16 %v276
    %v1059 = vunpack.c.l.b16 %v277
    %v1060 = vunpack.c.l.b16 %v278
    %v1061 = vunpack.c.l.b16 %v279
    %v1062 = vunpack.c.l.b16 %v280
    %v1063 = vpack.c.b16 %v1052, %v1051
    %v1064 = vpack.c.b16 %v1054, %v1053
    %v1065 = vpack.c.b16 %v1056, %v1055
    %v1066 = vpack.c.b16 %v1058, %v1057
    %v1067 = vpack.c.b16 %v1060, %v1059
    %v1068 = vpack.c.b16 %v1062, %v1061
    %v1075 = vcombine.low %v686, %v694
    %v1076 = vcombine.low %v693, %v695
    %v1078 = vunpack.c.l.s4 1983009808
    %v1079 = vunpack.c.0.s8 %v1078
    %v1080 = vlaneseq
    %v1081 = vshrl.u32 %v1080, 7
    %v1082 = vsub.s32 %v1079, %v1081
    %v1083 = vrot.slane %v1075, %v1082
    %v1085 = vunpack.c.l.s4 1983009808
    %v1086 = vunpack.c.0.s8 %v1085
    %v1087 = vlaneseq
    %v1088 = vshrl.u32 %v1087, 7
    %v1089 = vsub.s32 %v1086, %v1088
    %v1090 = vrot.slane %v1076, %v1089
    %v1091 = vcombine.low %v1083, %v1090
    %v1092 = vcombine.low %v693, %v686
    %v1094 = vunpack.c.l.s4 1983009808
    %v1095 = vunpack.c.0.s8 %v1094
    %v1096 = vlaneseq
    %v1097 = vshrl.u32 %v1096, 7
    %v1098 = vsub.s32 %v1095, %v1097
    %v1099 = vrot.slane %v1092, %v1098
    %v1100 = vcombine.low %v1083, %v1099
    %v1101 = vcombine.low %v694, %v693
    %v1102 = vcombine.low %v695, %v686
    %v1104 = vunpack.c.l.s4 1983009808
    %v1105 = vunpack.c.0.s8 %v1104
    %v1106 = vlaneseq
    %v1107 = vshrl.u32 %v1106, 7
    %v1108 = vsub.s32 %v1105, %v1107
    %v1109 = vrot.slane %v1101, %v1108
    %v1111 = vunpack.c.l.s4 1983009808
    %v1112 = vunpack.c.0.s8 %v1111
    %v1113 = vlaneseq
    %v1114 = vshrl.u32 %v1113, 7
    %v1115 = vsub.s32 %v1112, %v1114
    %v1116 = vrot.slane %v1102, %v1115
    %v1117 = vcombine.low %v1109, %v1116
    %v1118 = vcombine.low %v1109, %v1083
    %v1119 = vcombine.low %v1090, %v1083
    %v1120 = vcombine.low %v1099, %v1109
    %v1121 = vcombine.low %v1116, %v1109
    %vm1129 = vcmask 785408
    %v1131 = vsel %vm1129, %v744, 0
    %v1134 = vsel %vm1129, %v793, 0
    %v1137 = vsel %vm1129, %v842, 0
    %v1140 = vsel %vm1129, %v891, 0
    %v1143 = vsel %vm1129, %v940, 0
    %v1146 = vsel %vm1129, %v989, 0
    %v1149 = vsel %vm1129, %v1038, 0
    %1151 = vmatprep.subr.bf16.mxu0 0
    %1152 = vmatpush1.bf16.msra.mxu0 0
    %1153 = vmatprep.subr.bf16.mxu0 0
    %1154 = vmatpush1.bf16.msra.mxu0 0
    %1155 = vmatprep.subr.bf16.mxu0 0
    %1156 = vmatpush1.bf16.msra.mxu0 %v1068
    %1157 = vmatprep.subr.bf16.mxu0 0
    %1158 = vmatpush1.bf16.msra.mxu0 %v1067
    %1159 = vmatprep.subr.bf16.mxu0 0
    %1160 = vmatpush1.bf16.msra.mxu0 %v1066
    %1161 = vmatprep.subr.bf16.mxu0 0
    %1162 = vmatpush1.bf16.msra.mxu0 %v1065
    %1163 = vmatprep.subr.bf16.mxu0 0
    %1164 = vmatpush1.bf16.msra.mxu0 %v1064
    %1165 = vmatprep.subr.bf16.mxu0 0
    %1166 = vmatpush1.bf16.msra.mxu0 %v1063
    %1167 = vmatprep.subr.bf16.mxu0 0
    %1168 = vmatpush2.bf16.msra.mxu0 0
    %1169 = vmatprep.subr.bf16.mxu0 0
    %1170 = vmatpush2.bf16.msra.mxu0 0
    %1171 = vmatprep.subr.bf16.mxu0 0
    %1172 = vmatpush2.bf16.msra.mxu0 0
    %1173 = vmatprep.subr.bf16.mxu0 0
    %1174 = vmatpush2.bf16.msra.mxu0 0
    %1175 = vmatprep.subr.bf16.mxu0 0
    %1176 = vmatpush2.bf16.msra.mxu0 0
    %1177 = vmatprep.subr.bf16.mxu0 0
    %1178 = vmatpush2.bf16.msra.mxu0 0
    %1179 = vmatprep.subr.bf16.mxu0 0
    %1180 = vmatpush2.bf16.msra.mxu0 0
    %1181 = vmatprep.subr.bf16.mxu0 0
    %1182 = vmatpush2.bf16.msra.mxu0 0
    %1183 = vmatprep.mubr.bf16.mxu0 0
    %1184 = vmatmul.mubr.bf16.gmra.mxu0 %v1131
    %v1185 = vpop.f32.mrf.mxu0
    %v1186 = vadd.f32 %v1091, %v1185
    %v1187 = vpop.f32.mrf.mxu0
    %v1188 = vpop.f32.mrf.mxu0
    %v1189 = vadd.f32 %v1100, %v1188
    %v1190 = vpop.f32.mrf.mxu0
    %1191 = vmatprep.mubr.bf16.mxu0 0
    %1192 = vmatmul.mubr.bf16.gmra.mxu0 %v1134
    %v1193 = vpop.f32.mrf.mxu0
    %v1194 = vadd.f32 %v1117, %v1193
    %v1195 = vpop.f32.mrf.mxu0
    %v1196 = vpop.f32.mrf.mxu0
    %v1197 = vadd.f32 %v1118, %v1196
    %v1198 = vpop.f32.mrf.mxu0
    %1199 = vmatprep.mubr.bf16.mxu0 0
    %1200 = vmatmul.mubr.bf16.gmra.mxu0 %v1137
    %v1201 = vpop.f32.mrf.mxu0
    %v1202 = vadd.f32 %v1119, %v1201
    %v1203 = vpop.f32.mrf.mxu0
    %v1204 = vpop.f32.mrf.mxu0
    %v1205 = vadd.f32 %v1120, %v1204
    %v1206 = vpop.f32.mrf.mxu0
    %1207 = vmatprep.mubr.bf16.mxu0 0
    %1208 = vmatmul.mubr.bf16.gmra.mxu0 %v1140
    %v1209 = vpop.f32.mrf.mxu0
    %v1210 = vadd.f32 %v1121, %v1209
    %v1211 = vpop.f32.mrf.mxu0
    %v1212 = vpop.f32.mrf.mxu0
    %v1213 = vadd.f32 %v1091, %v1212
    %v1214 = vpop.f32.mrf.mxu0
    %1215 = vmatprep.mubr.bf16.mxu0 0
    %1216 = vmatmul.mubr.bf16.gmra.mxu0 %v1143
    %v1217 = vpop.f32.mrf.mxu0
    %v1218 = vadd.f32 %v1100, %v1217
    %v1219 = vpop.f32.mrf.mxu0
    %v1220 = vpop.f32.mrf.mxu0
    %v1221 = vadd.f32 %v1117, %v1220
    %v1222 = vpop.f32.mrf.mxu0
    %1223 = vmatprep.mubr.bf16.mxu0 0
    %1224 = vmatmul.mubr.bf16.gmra.mxu0 %v1146
    %v1225 = vpop.f32.mrf.mxu0
    %v1226 = vadd.f32 %v1118, %v1225
    %v1227 = vpop.f32.mrf.mxu0
    %v1228 = vpop.f32.mrf.mxu0
    %v1229 = vadd.f32 %v1119, %v1228
    %v1230 = vpop.f32.mrf.mxu0
    %1231 = vmatprep.mubr.bf16.mxu0 0
    %1232 = vmatmul.mubr.bf16.gmra.mxu0 %v1149
    %v1233 = vpop.f32.mrf.mxu0
    %v1234 = vadd.f32 %v1120, %v1233
    %v1235 = vpop.f32.mrf.mxu0
    %v1236 = vpop.f32.mrf.mxu0
    %v1237 = vadd.f32 %v1121, %v1236
    %v1238 = vpop.f32.mrf.mxu0
    %1239 = vdwg.mxu0
    %v1254 = vcombine.high %v1186, %v1186
    %v1256 = vunpack.c.l.s4 1983009808
    %v1257 = vunpack.c.0.s8 %v1256
    %v1258 = vlaneseq
    %v1259 = vshrl.u32 %v1258, 7
    %v1260 = vsub.s32 %v1257, %v1259
    %v1261 = vrot.slane %v1186, %v1260
    %v1263 = vunpack.c.l.s4 1983009808
    %v1264 = vunpack.c.0.s8 %v1263
    %v1265 = vlaneseq
    %v1266 = vshrl.u32 %v1265, 7
    %v1267 = vsub.s32 %v1264, %v1266
    %v1268 = vrot.slane %v1254, %v1267
    %v1269 = vcombine.high %v1261, %v1261
    %v1270 = vcombine.high %v1268, %v1268
    %v1271 = vcombine.high %v1189, %v1189
    %v1273 = vunpack.c.l.s4 1983009808
    %v1274 = vunpack.c.0.s8 %v1273
    %v1275 = vlaneseq
    %v1276 = vshrl.u32 %v1275, 7
    %v1277 = vsub.s32 %v1274, %v1276
    %v1278 = vrot.slane %v1189, %v1277
    %v1280 = vunpack.c.l.s4 1983009808
    %v1281 = vunpack.c.0.s8 %v1280
    %v1282 = vlaneseq
    %v1283 = vshrl.u32 %v1282, 7
    %v1284 = vsub.s32 %v1281, %v1283
    %v1285 = vrot.slane %v1271, %v1284
    %v1286 = vcombine.high %v1278, %v1278
    %v1287 = vcombine.high %v1285, %v1285
    %v1288 = vcombine.high %v1194, %v1194
    %v1290 = vunpack.c.l.s4 1983009808
    %v1291 = vunpack.c.0.s8 %v1290
    %v1292 = vlaneseq
    %v1293 = vshrl.u32 %v1292, 7
    %v1294 = vsub.s32 %v1291, %v1293
    %v1295 = vrot.slane %v1194, %v1294
    %v1297 = vunpack.c.l.s4 1983009808
    %v1298 = vunpack.c.0.s8 %v1297
    %v1299 = vlaneseq
    %v1300 = vshrl.u32 %v1299, 7
    %v1301 = vsub.s32 %v1298, %v1300
    %v1302 = vrot.slane %v1288, %v1301
    %v1303 = vcombine.high %v1295, %v1295
    %v1304 = vcombine.high %v1302, %v1302
    %v1305 = vcombine.high %v1197, %v1197
    %v1307 = vunpack.c.l.s4 1983009808
    %v1308 = vunpack.c.0.s8 %v1307
    %v1309 = vlaneseq
    %v1310 = vshrl.u32 %v1309, 7
    %v1311 = vsub.s32 %v1308, %v1310
    %v1312 = vrot.slane %v1197, %v1311
    %v1314 = vunpack.c.l.s4 1983009808
    %v1315 = vunpack.c.0.s8 %v1314
    %v1316 = vlaneseq
    %v1317 = vshrl.u32 %v1316, 7
    %v1318 = vsub.s32 %v1315, %v1317
    %v1319 = vrot.slane %v1305, %v1318
    %v1320 = vcombine.high %v1312, %v1312
    %v1321 = vcombine.high %v1319, %v1319
    %v1322 = vcombine.high %v1202, %v1202
    %v1324 = vunpack.c.l.s4 1983009808
    %v1325 = vunpack.c.0.s8 %v1324
    %v1326 = vlaneseq
    %v1327 = vshrl.u32 %v1326, 7
    %v1328 = vsub.s32 %v1325, %v1327
    %v1329 = vrot.slane %v1202, %v1328
    %v1331 = vunpack.c.l.s4 1983009808
    %v1332 = vunpack.c.0.s8 %v1331
    %v1333 = vlaneseq
    %v1334 = vshrl.u32 %v1333, 7
    %v1335 = vsub.s32 %v1332, %v1334
    %v1336 = vrot.slane %v1322, %v1335
    %v1337 = vcombine.high %v1329, %v1329
    %v1338 = vcombine.high %v1336, %v1336
    %v1339 = vcombine.high %v1205, %v1205
    %v1341 = vunpack.c.l.s4 1983009808
    %v1342 = vunpack.c.0.s8 %v1341
    %v1343 = vlaneseq
    %v1344 = vshrl.u32 %v1343, 7
    %v1345 = vsub.s32 %v1342, %v1344
    %v1346 = vrot.slane %v1205, %v1345
    %v1348 = vunpack.c.l.s4 1983009808
    %v1349 = vunpack.c.0.s8 %v1348
    %v1350 = vlaneseq
    %v1351 = vshrl.u32 %v1350, 7
    %v1352 = vsub.s32 %v1349, %v1351
    %v1353 = vrot.slane %v1339, %v1352
    %v1354 = vcombine.high %v1346, %v1346
    %v1355 = vcombine.high %v1353, %v1353
    %v1356 = vcombine.high %v1210, %v1210
    %v1358 = vunpack.c.l.s4 1983009808
    %v1359 = vunpack.c.0.s8 %v1358
    %v1360 = vlaneseq
    %v1361 = vshrl.u32 %v1360, 7
    %v1362 = vsub.s32 %v1359, %v1361
    %v1363 = vrot.slane %v1210, %v1362
    %v1365 = vunpack.c.l.s4 1983009808
    %v1366 = vunpack.c.0.s8 %v1365
    %v1367 = vlaneseq
    %v1368 = vshrl.u32 %v1367, 7
    %v1369 = vsub.s32 %v1366, %v1368
    %v1370 = vrot.slane %v1356, %v1369
    %v1371 = vcombine.high %v1363, %v1363
    %v1372 = vcombine.high %v1370, %v1370
    %v1373 = vcombine.high %v1213, %v1213
    %v1375 = vunpack.c.l.s4 1983009808
    %v1376 = vunpack.c.0.s8 %v1375
    %v1377 = vlaneseq
    %v1378 = vshrl.u32 %v1377, 7
    %v1379 = vsub.s32 %v1376, %v1378
    %v1380 = vrot.slane %v1213, %v1379
    %v1382 = vunpack.c.l.s4 1983009808
    %v1383 = vunpack.c.0.s8 %v1382
    %v1384 = vlaneseq
    %v1385 = vshrl.u32 %v1384, 7
    %v1386 = vsub.s32 %v1383, %v1385
    %v1387 = vrot.slane %v1373, %v1386
    %v1388 = vcombine.high %v1380, %v1380
    %v1389 = vcombine.high %v1387, %v1387
    %v1390 = vcombine.high %v1218, %v1218
    %v1392 = vunpack.c.l.s4 1983009808
    %v1393 = vunpack.c.0.s8 %v1392
    %v1394 = vlaneseq
    %v1395 = vshrl.u32 %v1394, 7
    %v1396 = vsub.s32 %v1393, %v1395
    %v1397 = vrot.slane %v1218, %v1396
    %v1399 = vunpack.c.l.s4 1983009808
    %v1400 = vunpack.c.0.s8 %v1399
    %v1401 = vlaneseq
    %v1402 = vshrl.u32 %v1401, 7
    %v1403 = vsub.s32 %v1400, %v1402
    %v1404 = vrot.slane %v1390, %v1403
    %v1405 = vcombine.high %v1397, %v1397
    %v1406 = vcombine.high %v1404, %v1404
    %v1407 = vcombine.high %v1221, %v1221
    %v1409 = vunpack.c.l.s4 1983009808
    %v1410 = vunpack.c.0.s8 %v1409
    %v1411 = vlaneseq
    %v1412 = vshrl.u32 %v1411, 7
    %v1413 = vsub.s32 %v1410, %v1412
    %v1414 = vrot.slane %v1221, %v1413
    %v1416 = vunpack.c.l.s4 1983009808
    %v1417 = vunpack.c.0.s8 %v1416
    %v1418 = vlaneseq
    %v1419 = vshrl.u32 %v1418, 7
    %v1420 = vsub.s32 %v1417, %v1419
    %v1421 = vrot.slane %v1407, %v1420
    %v1422 = vcombine.high %v1414, %v1414
    %v1423 = vcombine.high %v1421, %v1421
    %v1424 = vcombine.high %v1226, %v1226
    %v1426 = vunpack.c.l.s4 1983009808
    %v1427 = vunpack.c.0.s8 %v1426
    %v1428 = vlaneseq
    %v1429 = vshrl.u32 %v1428, 7
    %v1430 = vsub.s32 %v1427, %v1429
    %v1431 = vrot.slane %v1226, %v1430
    %v1433 = vunpack.c.l.s4 1983009808
    %v1434 = vunpack.c.0.s8 %v1433
    %v1435 = vlaneseq
    %v1436 = vshrl.u32 %v1435, 7
    %v1437 = vsub.s32 %v1434, %v1436
    %v1438 = vrot.slane %v1424, %v1437
    %v1439 = vcombine.high %v1431, %v1431
    %v1440 = vcombine.high %v1438, %v1438
    %v1441 = vcombine.high %v1229, %v1229
    %v1443 = vunpack.c.l.s4 1983009808
    %v1444 = vunpack.c.0.s8 %v1443
    %v1445 = vlaneseq
    %v1446 = vshrl.u32 %v1445, 7
    %v1447 = vsub.s32 %v1444, %v1446
    %v1448 = vrot.slane %v1229, %v1447
    %v1450 = vunpack.c.l.s4 1983009808
    %v1451 = vunpack.c.0.s8 %v1450
    %v1452 = vlaneseq
    %v1453 = vshrl.u32 %v1452, 7
    %v1454 = vsub.s32 %v1451, %v1453
    %v1455 = vrot.slane %v1441, %v1454
    %v1456 = vcombine.high %v1448, %v1448
    %v1457 = vcombine.high %v1455, %v1455
    %v1458 = vcombine.high %v1234, %v1234
    %v1460 = vunpack.c.l.s4 1983009808
    %v1461 = vunpack.c.0.s8 %v1460
    %v1462 = vlaneseq
    %v1463 = vshrl.u32 %v1462, 7
    %v1464 = vsub.s32 %v1461, %v1463
    %v1465 = vrot.slane %v1234, %v1464
    %v1467 = vunpack.c.l.s4 1983009808
    %v1468 = vunpack.c.0.s8 %v1467
    %v1469 = vlaneseq
    %v1470 = vshrl.u32 %v1469, 7
    %v1471 = vsub.s32 %v1468, %v1470
    %v1472 = vrot.slane %v1458, %v1471
    %v1473 = vcombine.high %v1465, %v1465
    %v1474 = vcombine.high %v1472, %v1472
    %v1475 = vcombine.high %v1237, %v1237
    %v1477 = vunpack.c.l.s4 1983009808
    %v1478 = vunpack.c.0.s8 %v1477
    %v1479 = vlaneseq
    %v1480 = vshrl.u32 %v1479, 7
    %v1481 = vsub.s32 %v1478, %v1480
    %v1482 = vrot.slane %v1237, %v1481
    %v1484 = vunpack.c.l.s4 1983009808
    %v1485 = vunpack.c.0.s8 %v1484
    %v1486 = vlaneseq
    %v1487 = vshrl.u32 %v1486, 7
    %v1488 = vsub.s32 %v1485, %v1487
    %v1489 = vrot.slane %v1475, %v1488
    %v1490 = vcombine.high %v1482, %v1482
    %v1491 = vcombine.high %v1489, %v1489
    %v1548 = vmax.f32 %v1261, 0.0
    %v1549 = vmax.f32 %v1269, 0.0
    %v1550 = vmax.f32 %v1268, 0.0
    %v1551 = vmax.f32 %v1270, 0.0
    %v1552 = vmax.f32 %v1278, 0.0
    %v1553 = vmax.f32 %v1286, 0.0
    %v1554 = vmax.f32 %v1285, 0.0
    %v1555 = vmax.f32 %v1287, 0.0
    %v1556 = vmax.f32 %v1295, 0.0
    %v1557 = vmax.f32 %v1303, 0.0
    %v1558 = vmax.f32 %v1302, 0.0
    %v1559 = vmax.f32 %v1304, 0.0
    %v1560 = vmax.f32 %v1312, 0.0
    %v1561 = vmax.f32 %v1320, 0.0
    %v1562 = vmax.f32 %v1319, 0.0
    %v1563 = vmax.f32 %v1321, 0.0
    %v1564 = vmax.f32 %v1329, 0.0
    %v1565 = vmax.f32 %v1337, 0.0
    %v1566 = vmax.f32 %v1336, 0.0
    %v1567 = vmax.f32 %v1338, 0.0
    %v1568 = vmax.f32 %v1346, 0.0
    %v1569 = vmax.f32 %v1354, 0.0
    %v1570 = vmax.f32 %v1353, 0.0
    %v1571 = vmax.f32 %v1355, 0.0
    %v1572 = vmax.f32 %v1363, 0.0
    %v1573 = vmax.f32 %v1371, 0.0
    %v1574 = vmax.f32 %v1370, 0.0
    %v1575 = vmax.f32 %v1372, 0.0
    %v1576 = vmax.f32 %v1380, 0.0
    %v1577 = vmax.f32 %v1388, 0.0
    %v1578 = vmax.f32 %v1387, 0.0
    %v1579 = vmax.f32 %v1389, 0.0
    %v1580 = vmax.f32 %v1397, 0.0
    %v1581 = vmax.f32 %v1405, 0.0
    %v1582 = vmax.f32 %v1404, 0.0
    %v1583 = vmax.f32 %v1406, 0.0
    %v1584 = vmax.f32 %v1414, 0.0
    %v1585 = vmax.f32 %v1422, 0.0
    %v1586 = vmax.f32 %v1421, 0.0
    %v1587 = vmax.f32 %v1423, 0.0
    %v1588 = vmax.f32 %v1431, 0.0
    %v1589 = vmax.f32 %v1439, 0.0
    %v1590 = vmax.f32 %v1438, 0.0
    %v1591 = vmax.f32 %v1440, 0.0
    %v1592 = vmax.f32 %v1448, 0.0
    %v1593 = vmax.f32 %v1456, 0.0
    %v1594 = vmax.f32 %v1455, 0.0
    %v1595 = vmax.f32 %v1457, 0.0
    %v1596 = vmax.f32 %v1465, 0.0
    %v1597 = vmax.f32 %v1473, 0.0
    %v1598 = vmax.f32 %v1472, 0.0
    %v1599 = vmax.f32 %v1474, 0.0
    %v1600 = vmax.f32 %v1482, 0.0
    %v1601 = vmax.f32 %v1490, 0.0
    %v1602 = vmax.f32 %v1489, 0.0
    %v1603 = vmax.f32 %v1491, 0.0
    %v1660 = vcombine.low %v1548, %v1549
    %v1661 = vcombine.low %v1550, %v1551
    %v1663 = vunpack.c.l.s4 1983009808
    %v1664 = vunpack.c.0.s8 %v1663
    %v1665 = vlaneseq
    %v1666 = vshrl.u32 %v1665, 7
    %v1667 = vsub.s32 %v1664, %v1666
    %v1668 = vrot.slane %v1660, %v1667
    %v1670 = vunpack.c.l.s4 1983009808
    %v1671 = vunpack.c.0.s8 %v1670
    %v1672 = vlaneseq
    %v1673 = vshrl.u32 %v1672, 7
    %v1674 = vsub.s32 %v1671, %v1673
    %v1675 = vrot.slane %v1661, %v1674
    %v1676 = vcombine.low %v1668, %v1675
    %v1677 = vcombine.low %v1552, %v1553
    %v1679 = vunpack.c.l.s4 1983009808
    %v1680 = vunpack.c.0.s8 %v1679
    %v1681 = vlaneseq
    %v1682 = vshrl.u32 %v1681, 7
    %v1683 = vsub.s32 %v1680, %v1682
    %v1684 = vrot.slane %v1677, %v1683
    %v1686 = vunpack.c.l.s4 1983009808
    %v1687 = vunpack.c.0.s8 %v1686
    %v1688 = vlaneseq
    %v1689 = vshrl.u32 %v1688, 7
    %v1690 = vsub.s32 %v1687, %v1689
    %v1691 = vrot.slane %v1554, %v1690
    %v1692 = vcombine.low %v1684, %v1691
    %v1693 = vcombine.low %v1555, %v1556
    %v1694 = vcombine.low %v1557, %v1558
    %v1696 = vunpack.c.l.s4 1983009808
    %v1697 = vunpack.c.0.s8 %v1696
    %v1698 = vlaneseq
    %v1699 = vshrl.u32 %v1698, 7
    %v1700 = vsub.s32 %v1697, %v1699
    %v1701 = vrot.slane %v1693, %v1700
    %v1703 = vunpack.c.l.s4 1983009808
    %v1704 = vunpack.c.0.s8 %v1703
    %v1705 = vlaneseq
    %v1706 = vshrl.u32 %v1705, 7
    %v1707 = vsub.s32 %v1704, %v1706
    %v1708 = vrot.slane %v1694, %v1707
    %v1709 = vcombine.low %v1701, %v1708
    %v1710 = vcombine.low %v1559, %v1560
    %v1712 = vunpack.c.l.s4 1983009808
    %v1713 = vunpack.c.0.s8 %v1712
    %v1714 = vlaneseq
    %v1715 = vshrl.u32 %v1714, 7
    %v1716 = vsub.s32 %v1713, %v1715
    %v1717 = vrot.slane %v1710, %v1716
    %v1719 = vunpack.c.l.s4 1983009808
    %v1720 = vunpack.c.0.s8 %v1719
    %v1721 = vlaneseq
    %v1722 = vshrl.u32 %v1721, 7
    %v1723 = vsub.s32 %v1720, %v1722
    %v1724 = vrot.slane %v1561, %v1723
    %v1725 = vcombine.low %v1717, %v1724
    %v1726 = vcombine.low %v1562, %v1563
    %v1727 = vcombine.low %v1564, %v1565
    %v1729 = vunpack.c.l.s4 1983009808
    %v1730 = vunpack.c.0.s8 %v1729
    %v1731 = vlaneseq
    %v1732 = vshrl.u32 %v1731, 7
    %v1733 = vsub.s32 %v1730, %v1732
    %v1734 = vrot.slane %v1726, %v1733
    %v1736 = vunpack.c.l.s4 1983009808
    %v1737 = vunpack.c.0.s8 %v1736
    %v1738 = vlaneseq
    %v1739 = vshrl.u32 %v1738, 7
    %v1740 = vsub.s32 %v1737, %v1739
    %v1741 = vrot.slane %v1727, %v1740
    %v1742 = vcombine.low %v1734, %v1741
    %v1743 = vcombine.low %v1566, %v1567
    %v1745 = vunpack.c.l.s4 1983009808
    %v1746 = vunpack.c.0.s8 %v1745
    %v1747 = vlaneseq
    %v1748 = vshrl.u32 %v1747, 7
    %v1749 = vsub.s32 %v1746, %v1748
    %v1750 = vrot.slane %v1743, %v1749
    %v1752 = vunpack.c.l.s4 1983009808
    %v1753 = vunpack.c.0.s8 %v1752
    %v1754 = vlaneseq
    %v1755 = vshrl.u32 %v1754, 7
    %v1756 = vsub.s32 %v1753, %v1755
    %v1757 = vrot.slane %v1568, %v1756
    %v1758 = vcombine.low %v1750, %v1757
    %v1759 = vcombine.low %v1569, %v1570
    %v1760 = vcombine.low %v1571, %v1572
    %v1762 = vunpack.c.l.s4 1983009808
    %v1763 = vunpack.c.0.s8 %v1762
    %v1764 = vlaneseq
    %v1765 = vshrl.u32 %v1764, 7
    %v1766 = vsub.s32 %v1763, %v1765
    %v1767 = vrot.slane %v1759, %v1766
    %v1769 = vunpack.c.l.s4 1983009808
    %v1770 = vunpack.c.0.s8 %v1769
    %v1771 = vlaneseq
    %v1772 = vshrl.u32 %v1771, 7
    %v1773 = vsub.s32 %v1770, %v1772
    %v1774 = vrot.slane %v1760, %v1773
    %v1775 = vcombine.low %v1767, %v1774
    %v1776 = vcombine.low %v1573, %v1574
    %v1778 = vunpack.c.l.s4 1983009808
    %v1779 = vunpack.c.0.s8 %v1778
    %v1780 = vlaneseq
    %v1781 = vshrl.u32 %v1780, 7
    %v1782 = vsub.s32 %v1779, %v1781
    %v1783 = vrot.slane %v1776, %v1782
    %v1785 = vunpack.c.l.s4 1983009808
    %v1786 = vunpack.c.0.s8 %v1785
    %v1787 = vlaneseq
    %v1788 = vshrl.u32 %v1787, 7
    %v1789 = vsub.s32 %v1786, %v1788
    %v1790 = vrot.slane %v1575, %v1789
    %v1791 = vcombine.low %v1783, %v1790
    %v1792 = vcombine.low %v1576, %v1577
    %v1793 = vcombine.low %v1578, %v1579
    %v1795 = vunpack.c.l.s4 1983009808
    %v1796 = vunpack.c.0.s8 %v1795
    %v1797 = vlaneseq
    %v1798 = vshrl.u32 %v1797, 7
    %v1799 = vsub.s32 %v1796, %v1798
    %v1800 = vrot.slane %v1792, %v1799
    %v1802 = vunpack.c.l.s4 1983009808
    %v1803 = vunpack.c.0.s8 %v1802
    %v1804 = vlaneseq
    %v1805 = vshrl.u32 %v1804, 7
    %v1806 = vsub.s32 %v1803, %v1805
    %v1807 = vrot.slane %v1793, %v1806
    %v1808 = vcombine.low %v1800, %v1807
    %v1809 = vcombine.low %v1580, %v1581
    %v1811 = vunpack.c.l.s4 1983009808
    %v1812 = vunpack.c.0.s8 %v1811
    %v1813 = vlaneseq
    %v1814 = vshrl.u32 %v1813, 7
    %v1815 = vsub.s32 %v1812, %v1814
    %v1816 = vrot.slane %v1809, %v1815
    %v1818 = vunpack.c.l.s4 1983009808
    %v1819 = vunpack.c.0.s8 %v1818
    %v1820 = vlaneseq
    %v1821 = vshrl.u32 %v1820, 7
    %v1822 = vsub.s32 %v1819, %v1821
    %v1823 = vrot.slane %v1582, %v1822
    %v1824 = vcombine.low %v1816, %v1823
    %v1825 = vcombine.low %v1583, %v1584
    %v1826 = vcombine.low %v1585, %v1586
    %v1828 = vunpack.c.l.s4 1983009808
    %v1829 = vunpack.c.0.s8 %v1828
    %v1830 = vlaneseq
    %v1831 = vshrl.u32 %v1830, 7
    %v1832 = vsub.s32 %v1829, %v1831
    %v1833 = vrot.slane %v1825, %v1832
    %v1835 = vunpack.c.l.s4 1983009808
    %v1836 = vunpack.c.0.s8 %v1835
    %v1837 = vlaneseq
    %v1838 = vshrl.u32 %v1837, 7
    %v1839 = vsub.s32 %v1836, %v1838
    %v1840 = vrot.slane %v1826, %v1839
    %v1841 = vcombine.low %v1833, %v1840
    %v1842 = vcombine.low %v1587, %v1588
    %v1844 = vunpack.c.l.s4 1983009808
    %v1845 = vunpack.c.0.s8 %v1844
    %v1846 = vlaneseq
    %v1847 = vshrl.u32 %v1846, 7
    %v1848 = vsub.s32 %v1845, %v1847
    %v1849 = vrot.slane %v1842, %v1848
    %v1851 = vunpack.c.l.s4 1983009808
    %v1852 = vunpack.c.0.s8 %v1851
    %v1853 = vlaneseq
    %v1854 = vshrl.u32 %v1853, 7
    %v1855 = vsub.s32 %v1852, %v1854
    %v1856 = vrot.slane %v1589, %v1855
    %v1857 = vcombine.low %v1849, %v1856
    %v1858 = vcombine.low %v1590, %v1591
    %v1859 = vcombine.low %v1592, %v1593
    %v1861 = vunpack.c.l.s4 1983009808
    %v1862 = vunpack.c.0.s8 %v1861
    %v1863 = vlaneseq
    %v1864 = vshrl.u32 %v1863, 7
    %v1865 = vsub.s32 %v1862, %v1864
    %v1866 = vrot.slane %v1858, %v1865
    %v1868 = vunpack.c.l.s4 1983009808
    %v1869 = vunpack.c.0.s8 %v1868
    %v1870 = vlaneseq
    %v1871 = vshrl.u32 %v1870, 7
    %v1872 = vsub.s32 %v1869, %v1871
    %v1873 = vrot.slane %v1859, %v1872
    %v1874 = vcombine.low %v1866, %v1873
    %v1875 = vcombine.low %v1594, %v1595
    %v1877 = vunpack.c.l.s4 1983009808
    %v1878 = vunpack.c.0.s8 %v1877
    %v1879 = vlaneseq
    %v1880 = vshrl.u32 %v1879, 7
    %v1881 = vsub.s32 %v1878, %v1880
    %v1882 = vrot.slane %v1875, %v1881
    %v1884 = vunpack.c.l.s4 1983009808
    %v1885 = vunpack.c.0.s8 %v1884
    %v1886 = vlaneseq
    %v1887 = vshrl.u32 %v1886, 7
    %v1888 = vsub.s32 %v1885, %v1887
    %v1889 = vrot.slane %v1596, %v1888
    %v1890 = vcombine.low %v1882, %v1889
    %v1891 = vcombine.low %v1597, %v1598
    %v1892 = vcombine.low %v1599, %v1600
    %v1894 = vunpack.c.l.s4 1983009808
    %v1895 = vunpack.c.0.s8 %v1894
    %v1896 = vlaneseq
    %v1897 = vshrl.u32 %v1896, 7
    %v1898 = vsub.s32 %v1895, %v1897
    %v1899 = vrot.slane %v1891, %v1898
    %v1901 = vunpack.c.l.s4 1983009808
    %v1902 = vunpack.c.0.s8 %v1901
    %v1903 = vlaneseq
    %v1904 = vshrl.u32 %v1903, 7
    %v1905 = vsub.s32 %v1902, %v1904
    %v1906 = vrot.slane %v1892, %v1905
    %v1907 = vcombine.low %v1899, %v1906
    %v1908 = vcombine.low %v1601, %v1602
    %v1910 = vunpack.c.l.s4 1983009808
    %v1911 = vunpack.c.0.s8 %v1910
    %v1912 = vlaneseq
    %v1913 = vshrl.u32 %v1912, 7
    %v1914 = vsub.s32 %v1911, %v1913
    %v1915 = vrot.slane %v1908, %v1914
    %v1917 = vunpack.c.l.s4 1983009808
    %v1918 = vunpack.c.0.s8 %v1917
    %v1919 = vlaneseq
    %v1920 = vshrl.u32 %v1919, 7
    %v1921 = vsub.s32 %v1918, %v1920
    %v1922 = vrot.slane %v1603, %v1921
    %v1923 = vcombine.low %v1915, %v1922
    %vm1940 = vcmask 1045504
    %v1941 = vsel %vm1940, %v1692, 0.0
    %v1942 = vadd.f32 %v1676, %v1941
    %v1943 = vrot.slane %v1942, 4
    %v1944 = vadd.f32 %v1942, %v1943
    %v1945 = vrot.slane %v1944, 2
    %v1946 = vadd.f32 %v1944, %v1945
    %v1947 = vrot.slane %v1946, 1
    %v1948 = vadd.f32 %v1946, %v1947
    %v1949 = vsel %vm1940, %v1725, 0.0
    %v1950 = vadd.f32 %v1709, %v1949
    %v1951 = vrot.slane %v1950, 4
    %v1952 = vadd.f32 %v1950, %v1951
    %v1953 = vrot.slane %v1952, 2
    %v1954 = vadd.f32 %v1952, %v1953
    %v1955 = vrot.slane %v1954, 1
    %v1956 = vadd.f32 %v1954, %v1955
    %v1957 = vsel %vm1940, %v1758, 0.0
    %v1958 = vadd.f32 %v1742, %v1957
    %v1959 = vrot.slane %v1958, 4
    %v1960 = vadd.f32 %v1958, %v1959
    %v1961 = vrot.slane %v1960, 2
    %v1962 = vadd.f32 %v1960, %v1961
    %v1963 = vrot.slane %v1962, 1
    %v1964 = vadd.f32 %v1962, %v1963
    %v1965 = vsel %vm1940, %v1791, 0.0
    %v1966 = vadd.f32 %v1775, %v1965
    %v1967 = vrot.slane %v1966, 4
    %v1968 = vadd.f32 %v1966, %v1967
    %v1969 = vrot.slane %v1968, 2
    %v1970 = vadd.f32 %v1968, %v1969
    %v1971 = vrot.slane %v1970, 1
    %v1972 = vadd.f32 %v1970, %v1971
    %v1973 = vsel %vm1940, %v1824, 0.0
    %v1974 = vadd.f32 %v1808, %v1973
    %v1975 = vrot.slane %v1974, 4
    %v1976 = vadd.f32 %v1974, %v1975
    %v1977 = vrot.slane %v1976, 2
    %v1978 = vadd.f32 %v1976, %v1977
    %v1979 = vrot.slane %v1978, 1
    %v1980 = vadd.f32 %v1978, %v1979
    %v1981 = vsel %vm1940, %v1857, 0.0
    %v1982 = vadd.f32 %v1841, %v1981
    %v1983 = vrot.slane %v1982, 4
    %v1984 = vadd.f32 %v1982, %v1983
    %v1985 = vrot.slane %v1984, 2
    %v1986 = vadd.f32 %v1984, %v1985
    %v1987 = vrot.slane %v1986, 1
    %v1988 = vadd.f32 %v1986, %v1987
    %v1989 = vsel %vm1940, %v1890, 0.0
    %v1990 = vadd.f32 %v1874, %v1989
    %v1991 = vrot.slane %v1990, 4
    %v1992 = vadd.f32 %v1990, %v1991
    %v1993 = vrot.slane %v1992, 2
    %v1994 = vadd.f32 %v1992, %v1993
    %v1995 = vrot.slane %v1994, 1
    %v1996 = vadd.f32 %v1994, %v1995
    %v1997 = vsel %vm1940, %v1923, 0.0
    %v1998 = vadd.f32 %v1907, %v1997
    %v1999 = vrot.slane %v1998, 4
    %v2000 = vadd.f32 %v1998, %v1999
    %v2001 = vrot.slane %v2000, 2
    %v2002 = vadd.f32 %v2000, %v2001
    %v2003 = vrot.slane %v2002, 1
    %v2004 = vadd.f32 %v2002, %v2003
    %v2005 = vmul.f32 %v1948, 0.071428575
    %v2006 = vmul.f32 %v1956, 0.071428575
    %v2007 = vmul.f32 %v1964, 0.071428575
    %v2008 = vmul.f32 %v1972, 0.071428575
    %v2009 = vmul.f32 %v1980, 0.071428575
    %v2010 = vmul.f32 %v1988, 0.071428575
    %v2011 = vmul.f32 %v1996, 0.071428575
    %v2012 = vmul.f32 %v2004, 0.071428575
    %v2013 = vpack.c.bf16 %v2005, %v2005
    %v2014 = vpack.c.bf16 %v2006, %v2006
    %v2015 = vpack.c.bf16 %v2007, %v2007
    %v2016 = vpack.c.bf16 %v2008, %v2008
    %v2017 = vpack.c.bf16 %v2009, %v2009
    %v2018 = vpack.c.bf16 %v2010, %v2010
    %v2019 = vpack.c.bf16 %v2011, %v2011
    %v2020 = vpack.c.bf16 %v2012, %v2012
    %v2021 = vld [vmem:[#allocation7] sm:$0xf]
    %v2022 = vld [vmem:[#allocation7 + $0x4] sm:$0xf]
    %v2023 = vld [vmem:[#allocation7 + $0x8] sm:$0xf]
    %v2024 = vld [vmem:[#allocation7 + $0xc] sm:$0xf]
    %v2025 = vld [vmem:[#allocation7 + $0x10] sm:$0xf]
    %v2026 = vld [vmem:[#allocation7 + $0x14] sm:$0xf]
    %v2027 = vld [vmem:[#allocation7 + $0x18] sm:$0xf]
    %v2028 = vld [vmem:[#allocation7 + $0x1c] sm:$0xf]
    %v2029 = vld [vmem:[#allocation7 + $0x20] sm:$0xf]
    %v2030 = vld [vmem:[#allocation7 + $0x24] sm:$0xf]
    %v2031 = vld [vmem:[#allocation7 + $0x28] sm:$0xf]
    %v2032 = vld [vmem:[#allocation7 + $0x2c] sm:$0xf]
    %v2033 = vld [vmem:[#allocation7 + $0x30] sm:$0xf]
    %v2034 = vld [vmem:[#allocation7 + $0x34] sm:$0xf]
    %v2035 = vld [vmem:[#allocation7 + $0x38] sm:$0xf]
    %v2036 = vld [vmem:[#allocation7 + $0x3c] sm:$0xf]
    %v2037 = vld [vmem:[%s4] sm:$0x1]
    %v2039 = vlaneseq
    %v2040 = vshrl.u32 %v2039, 7
    %v2041 = vsub.s32 0, %v2040
    %v2042 = vrot.slane %v2037, %v2041
    %v2052 = vunpack.c.l.b16 %v2013
    %v2053 = vunpack.c.l.b16 %v2014
    %v2054 = vunpack.c.l.b16 %v2015
    %v2055 = vunpack.c.l.b16 %v2016
    %v2056 = vunpack.c.l.b16 %v2017
    %v2057 = vunpack.c.l.b16 %v2018
    %v2058 = vunpack.c.l.b16 %v2019
    %v2059 = vunpack.c.l.b16 %v2020
    %vm2060 = vcmask 1041409
    %v2061 = vsel %vm2060, %v2053, %v2052
    %vm2062 = vcmask 1042434
    %v2063 = vsel %vm2062, %v2054, %v2061
    %vm2064 = vcmask 1043459
    %v2065 = vsel %vm2064, %v2055, %v2063
    %vm2066 = vcmask 1044484
    %v2067 = vsel %vm2066, %v2056, %v2065
    %vm2068 = vcmask 1045509
    %v2069 = vsel %vm2068, %v2057, %v2067
    %vm2070 = vcmask 1046534
    %v2071 = vsel %vm2070, %v2058, %v2069
    %vm2072 = vcmask 1047559
    %v2073 = vsel %vm2072, %v2059, %v2071
    %v2074 = vpack.c.b16 %v2073, %v2073
    %v2092 = vunpack.c.l.b16 %v2021
    %v2093 = vunpack.c.l.b16 %v2022
    %v2094 = vunpack.c.l.b16 %v2023
    %v2095 = vunpack.c.l.b16 %v2024
    %v2096 = vunpack.c.l.b16 %v2025
    %v2097 = vunpack.c.l.b16 %v2026
    %v2098 = vunpack.c.l.b16 %v2027
    %v2099 = vunpack.c.l.b16 %v2028
    %v2100 = vunpack.c.l.b16 %v2029
    %v2101 = vunpack.c.l.b16 %v2030
    %v2102 = vunpack.c.l.b16 %v2031
    %v2103 = vunpack.c.l.b16 %v2032
    %v2104 = vunpack.c.l.b16 %v2033
    %v2105 = vunpack.c.l.b16 %v2034
    %v2106 = vunpack.c.l.b16 %v2035
    %v2107 = vunpack.c.l.b16 %v2036
    %v2108 = vpack.c.b16 %v2093, %v2092
    %v2109 = vpack.c.b16 %v2095, %v2094
    %v2110 = vpack.c.b16 %v2097, %v2096
    %v2111 = vpack.c.b16 %v2099, %v2098
    %v2112 = vpack.c.b16 %v2101, %v2100
    %v2113 = vpack.c.b16 %v2103, %v2102
    %v2114 = vpack.c.b16 %v2105, %v2104
    %v2115 = vpack.c.b16 %v2107, %v2106
    %2124 = vmatprep.subr.bf16.mxu0 0
    %2125 = vmatpush1.bf16.msra.mxu0 %v2115
    %2126 = vmatprep.subr.bf16.mxu0 0
    %2127 = vmatpush1.bf16.msra.mxu0 %v2114
    %2128 = vmatprep.subr.bf16.mxu0 0
    %2129 = vmatpush1.bf16.msra.mxu0 %v2113
    %2130 = vmatprep.subr.bf16.mxu0 0
    %2131 = vmatpush1.bf16.msra.mxu0 %v2112
    %2132 = vmatprep.subr.bf16.mxu0 0
    %2133 = vmatpush1.bf16.msra.mxu0 %v2111
    %2134 = vmatprep.subr.bf16.mxu0 0
    %2135 = vmatpush1.bf16.msra.mxu0 %v2110
    %2136 = vmatprep.subr.bf16.mxu0 0
    %2137 = vmatpush1.bf16.msra.mxu0 %v2109
    %2138 = vmatprep.subr.bf16.mxu0 0
    %2139 = vmatpush1.bf16.msra.mxu0 %v2108
    %2140 = vmatprep.subr.bf16.mxu0 0
    %2141 = vmatpush2.bf16.msra.mxu0 0
    %2142 = vmatprep.subr.bf16.mxu0 0
    %2143 = vmatpush2.bf16.msra.mxu0 0
    %2144 = vmatprep.subr.bf16.mxu0 0
    %2145 = vmatpush2.bf16.msra.mxu0 0
    %2146 = vmatprep.subr.bf16.mxu0 0
    %2147 = vmatpush2.bf16.msra.mxu0 0
    %2148 = vmatprep.subr.bf16.mxu0 0
    %2149 = vmatpush2.bf16.msra.mxu0 0
    %2150 = vmatprep.subr.bf16.mxu0 0
    %2151 = vmatpush2.bf16.msra.mxu0 0
    %2152 = vmatprep.subr.bf16.mxu0 0
    %2153 = vmatpush2.bf16.msra.mxu0 0
    %2154 = vmatprep.subr.bf16.mxu0 0
    %2155 = vmatpush2.bf16.msra.mxu0 0
    %2156 = vmatprep.mubr.bf16.mxu0 0
    %2157 = vmatmul.mubr.bf16.gmra.mxu0 %v2074
    %v2158 = vpop.f32.mrf.mxu0
    %v2159 = vadd.f32 %v2042, %v2158
    %v2160 = vpop.f32.mrf.mxu0
    %v2161 = vpop.f32.mrf.mxu0
    %v2162 = vpop.f32.mrf.mxu0
    %2163 = vdwg.mxu0
    %v2164 = vmax.f32 %v2159, 0.0
    %v2165 = vpack.c.bf16 %v2164, %v2164
    %v2166 = vld [vmem:[#allocation8] sm:$0xf]
    %v2167 = vld [vmem:[#allocation8 + $0x4] sm:$0xf]
    %v2168 = vld [vmem:[#allocation8 + $0x8] sm:$0xf]
    %v2169 = vld [vmem:[#allocation8 + $0xc] sm:$0xf]
    %v2170 = vld [vmem:[#allocation8 + $0x10] sm:$0xf]
    %v2171 = vld [vmem:[#allocation8 + $0x14] sm:$0xf]
    %v2172 = vld [vmem:[#allocation8 + $0x18] sm:$0xf]
    %v2173 = vld [vmem:[#allocation8 + $0x1c] sm:$0xf]
    %v2174 = vld [vmem:[#allocation8 + $0x20] sm:$0xf]
    %v2175 = vld [vmem:[#allocation8 + $0x24] sm:$0xf]
    %v2176 = vld [vmem:[#allocation8 + $0x28] sm:$0xf]
    %v2177 = vld [vmem:[#allocation8 + $0x2c] sm:$0xf]
    %v2178 = vld [vmem:[#allocation8 + $0x30] sm:$0xf]
    %v2179 = vld [vmem:[#allocation8 + $0x34] sm:$0xf]
    %v2180 = vld [vmem:[#allocation8 + $0x38] sm:$0xf]
    %v2181 = vld [vmem:[#allocation8 + $0x3c] sm:$0xf]
    %v2182 = vld [vmem:[%s6] sm:$0x1]
    %v2184 = vlaneseq
    %v2185 = vshrl.u32 %v2184, 7
    %v2186 = vsub.s32 0, %v2185
    %v2187 = vrot.slane %v2182, %v2186
    %v2205 = vunpack.c.l.b16 %v2166
    %v2206 = vunpack.c.l.b16 %v2167
    %v2207 = vunpack.c.l.b16 %v2168
    %v2208 = vunpack.c.l.b16 %v2169
    %v2209 = vunpack.c.l.b16 %v2170
    %v2210 = vunpack.c.l.b16 %v2171
    %v2211 = vunpack.c.l.b16 %v2172
    %v2212 = vunpack.c.l.b16 %v2173
    %v2213 = vunpack.c.l.b16 %v2174
    %v2214 = vunpack.c.l.b16 %v2175
    %v2215 = vunpack.c.l.b16 %v2176
    %v2216 = vunpack.c.l.b16 %v2177
    %v2217 = vunpack.c.l.b16 %v2178
    %v2218 = vunpack.c.l.b16 %v2179
    %v2219 = vunpack.c.l.b16 %v2180
    %v2220 = vunpack.c.l.b16 %v2181
    %v2221 = vpack.c.b16 %v2206, %v2205
    %v2222 = vpack.c.b16 %v2208, %v2207
    %v2223 = vpack.c.b16 %v2210, %v2209
    %v2224 = vpack.c.b16 %v2212, %v2211
    %v2225 = vpack.c.b16 %v2214, %v2213
    %v2226 = vpack.c.b16 %v2216, %v2215
    %v2227 = vpack.c.b16 %v2218, %v2217
    %v2228 = vpack.c.b16 %v2220, %v2219
    %2237 = vmatprep.subr.bf16.mxu0 0
    %2238 = vmatpush1.bf16.msra.mxu0 %v2228
    %2239 = vmatprep.subr.bf16.mxu0 0
    %2240 = vmatpush1.bf16.msra.mxu0 %v2227
    %2241 = vmatprep.subr.bf16.mxu0 0
    %2242 = vmatpush1.bf16.msra.mxu0 %v2226
    %2243 = vmatprep.subr.bf16.mxu0 0
    %2244 = vmatpush1.bf16.msra.mxu0 %v2225
    %2245 = vmatprep.subr.bf16.mxu0 0
    %2246 = vmatpush1.bf16.msra.mxu0 %v2224
    %2247 = vmatprep.subr.bf16.mxu0 0
    %2248 = vmatpush1.bf16.msra.mxu0 %v2223
    %2249 = vmatprep.subr.bf16.mxu0 0
    %2250 = vmatpush1.bf16.msra.mxu0 %v2222
    %2251 = vmatprep.subr.bf16.mxu0 0
    %2252 = vmatpush1.bf16.msra.mxu0 %v2221
    %2253 = vmatprep.subr.bf16.mxu0 0
    %2254 = vmatpush2.bf16.msra.mxu0 0
    %2255 = vmatprep.subr.bf16.mxu0 0
    %2256 = vmatpush2.bf16.msra.mxu0 0
    %2257 = vmatprep.subr.bf16.mxu0 0
    %2258 = vmatpush2.bf16.msra.mxu0 0
    %2259 = vmatprep.subr.bf16.mxu0 0
    %2260 = vmatpush2.bf16.msra.mxu0 0
    %2261 = vmatprep.subr.bf16.mxu0 0
    %2262 = vmatpush2.bf16.msra.mxu0 0
    %2263 = vmatprep.subr.bf16.mxu0 0
    %2264 = vmatpush2.bf16.msra.mxu0 0
    %2265 = vmatprep.subr.bf16.mxu0 0
    %2266 = vmatpush2.bf16.msra.mxu0 0
    %2267 = vmatprep.subr.bf16.mxu0 0
    %2268 = vmatpush2.bf16.msra.mxu0 0
    %2269 = vmatprep.mubr.bf16.mxu0 0
    %2270 = vmatmul.mubr.bf16.gmra.mxu0 %v2165
    %v2271 = vpop.f32.mrf.mxu0
    %v2272 = vadd.f32 %v2187, %v2271
    %v2273 = vpop.f32.mrf.mxu0
    %v2274 = vpop.f32.mrf.mxu0
    %v2275 = vpop.f32.mrf.mxu0
    %2276 = vdwg.mxu0
    %2277 = vmax.xlane.f32.xlu0 %v2272
    %v2278 = vpop.xlane.xlu0 %2277
    %v2279 = vsub.f32 %v2272, %v2278
    %v2280 = vmul.f32 %v2279, 1.442695
    %v2281 = vpow.pop %v2280
    %2282 = vadd.xlane.f32.xlu0 %v2281
    %v2283 = vpop.xlane.xlu0 %2282
    %v2284 = vrcp.pop %v2283
    %v2285 = vmul.f32 %v2281, %v2284
    %2286 = vst [vmem:[#allocation10] sm:$0xff] %v2285
    // Predicated region
    $region46: #{tpu_custom_call.1} parent=1 // pred_check
      _
    $region47: #{tpu_custom_call.1} parent=1 // pred_check_branch
      %2288 = sbr.rel (0) target = $region49
    $region48: #{tpu_custom_call.1} parent=1 // pred_region
      %s2290 = ssub.s32 128, 128
      %2291 = vsyncadd [#allocation4], %s2290
      %s2293 = sshll.u32 [#allocation10], 4
      %s2294 = int_to_ptr.vmem [resolvable:$true] %s2293
      %2296 = dma.vmem_to_hbm [thread:$0]  %s2294, 128, %s7, [#allocation4]
    $region49: #{tpu_custom_call.1} parent=1 // pred_fallthru
      _
    // Predicated region
    $region50: #{tpu_custom_call.1} parent=1 // pred_check
      _
    $region51: #{tpu_custom_call.1} parent=1 // pred_check_branch
      %2298 = sbr.rel (0) target = $region53
    $region52: #{tpu_custom_call.1} parent=1 // pred_region
      %2299 = dma.done [#allocation4], 128
    $region53: #{tpu_custom_call.1} parent=1 // pred_fallthru
      _
    %2300 = vsyncpa [#allocation3], 1
    %2301 = vsyncpa [#allocation6], 1
    %2302 = vsyncpa [#allocation9], 1
    %2303 = vsyncpa [#allocation4], 1

</llo_original>
